<compile_context>
chip_gen: v7x
topology: tpu7x:2x2x1
jax: 0.10.0
libtpu: 0.0.40
codegen_flags: <defaults>
</compile_context>

<pallas_src>
import functools
import numpy as np
import jax
import jax.numpy as jnp
from jax import lax
from jax.experimental import pallas as pl
from jax.experimental.pallas import tpu as pltpu


def _round_up(a, b):
    return ((a + b - 1) // b) * b


def _tcn_kernel(x_ref, w_ref, shift_ref, o_ref, *, stride, V, t_tile):
    # x_ref:     (T_in*V, C_in)      bf16  one batch element, (time, joint) rows flattened
    # w_ref:     (K, C_in, C_out)    bf16  BN scale pre-folded, C_out zero-padded to 128-multiple
    # shift_ref: (1, C_out)          f32   BN shift (includes conv bias)
    # o_ref:     (t_tile*V, C_out)   f32   lane-dense output tile
    K = w_ref.shape[0]
    C_in = w_ref.shape[1]
    C_out = w_ref.shape[2]

    t0 = pl.program_id(1) * (t_tile * stride)     # first input timestep of this output tile

    acc = jnp.zeros((t_tile * V, C_out), jnp.float32)
    for k in range(K):                            # K is small (e.g. 5) -> fully unrolled
        start = (t0 + k) * V
        if V % 8 == 0:
            start = pl.multiple_of(start, 8)
        if stride == 1:
            xs = x_ref[pl.ds(start, t_tile * V), :]
        else:
            # contiguous load, then keep the first V rows of every (stride*V)-row group
            xw = x_ref[pl.ds(start, t_tile * stride * V), :]
            xs = xw.reshape(t_tile, stride * V, C_in)[:, :V, :].reshape(t_tile * V, C_in)
        acc = acc + jnp.dot(xs, w_ref[k], preferred_element_type=jnp.float32)

    o_ref[...] = (acc + shift_ref[...]).astype(o_ref.dtype)   # (1, C_out) broadcasts over rows


def unit_tcn_forward(x_nchw, weight, bias, bn_gamma, bn_beta, bn_mean, bn_var,
                     *, kernel_size=5, stride=1, eps=1e-5, t_tile=128):
    """x_nchw: (N, C_in, T, V) float32.  Returns (N, C_out, T_out, V) float32."""
    N, C_in, T, V = x_nchw.shape
    C_out = weight.shape[0]
    K = kernel_size
    pad = (K - 1) // 2
    T_out = (T + 2 * pad - K) // stride + 1

    # --- output-time tiling (grid axis 1); tile must be a multiple of 8 sublanes ---
    t_tile = max(8, min(_round_up(t_tile, 8), _round_up(T_out, 8)))
    num_t = (T_out + t_tile - 1) // t_tile
    T_out_pad = num_t * t_tile

    # --- lane-dense output channels ---
    C_out_pad = _round_up(C_out, 128)

    # padded input time length so every in-kernel slice stays in bounds for all tiles/taps
    T_in = T_out_pad * stride + K - 1

    # ---- glue (fuses under jit): layout + halo pad + bf16 cast + flatten ----
    x = jnp.transpose(x_nchw, (0, 2, 3, 1))                        # (N, T, V, C_in)
    x = jnp.pad(x, ((0, 0), (pad, T_in - T - pad), (0, 0), (0, 0)))
    x = x.astype(jnp.bfloat16).reshape(N, T_in * V, C_in)          # (N, T_in*V, C_in)

    # ---- fold BN (inference running stats) + conv bias into weights / shift ----
    scale = bn_gamma / jnp.sqrt(bn_var + eps)                      # (C_out,)
    shift = bn_beta + (bias - bn_mean) * scale                     # (C_out,)
    w = jnp.transpose(weight[:, :, :, 0], (2, 1, 0)) * scale       # (K, C_in, C_out), scale folded
    w = jnp.pad(w, ((0, 0), (0, 0), (0, C_out_pad - C_out))).astype(jnp.bfloat16)
    shift = jnp.pad(shift, (0, C_out_pad - C_out)).reshape(1, C_out_pad).astype(jnp.float32)

    kernel = functools.partial(_tcn_kernel, stride=stride, V=V, t_tile=t_tile)

    out = pl.pallas_call(
        kernel,
        out_shape=jax.ShapeDtypeStruct((N, T_out_pad * V, C_out_pad), jnp.float32),
        grid_spec=pltpu.PrefetchScalarGridSpec(
            num_scalar_prefetch=0,
            grid=(N, num_t),
            in_specs=[
                # whole padded batch element; constant block index across t -> stays VMEM-resident
                pl.BlockSpec((None, T_in * V, C_in), lambda n, t: (n, 0, 0)),
                pl.BlockSpec((K, C_in, C_out_pad), lambda n, t: (0, 0, 0)),
                pl.BlockSpec((1, C_out_pad), lambda n, t: (0, 0)),
            ],
            out_specs=pl.BlockSpec((None, t_tile * V, C_out_pad), lambda n, t: (n, t, 0)),
        ),
        compiler_params=pltpu.CompilerParams(
            dimension_semantics=("parallel", "parallel"),
            vmem_limit_bytes=64 * 1024 * 1024),
    )(x, w, shift)

    out = out.reshape(N, T_out_pad, V, C_out_pad)[:, :T_out, :, :C_out]
    return jnp.transpose(out, (0, 3, 1, 2))                        # (N, C_out, T_out, V)


def _reference(x_nchw, weight, bias, bn_gamma, bn_beta, bn_mean, bn_var,
               *, kernel_size=5, stride=1, eps=1e-5):
    pad = (kernel_size - 1) // 2
    y = lax.conv_general_dilated(
        x_nchw, weight, window_strides=(stride, 1),
        padding=((pad, pad), (0, 0)),
        dimension_numbers=("NCHW", "OIHW", "NCHW"))
    y = y + bias.reshape(1, -1, 1, 1)
    scale = bn_gamma / jnp.sqrt(bn_var + eps)
    return (y - bn_mean.reshape(1, -1, 1, 1)) * scale.reshape(1, -1, 1, 1) \
        + bn_beta.reshape(1, -1, 1, 1)


if __name__ == "__main__":
    key = jax.random.PRNGKey(0)
    N, C_in, C_out, T, V = 2, 4, 8, 16, 16
    K = 5

    k_x, k_w = jax.random.split(key)
    x = jax.random.normal(k_x, (N, C_in, T, V), dtype=jnp.float32)

    # conv_init: kaiming_normal_(mode='fan_out') -> std = sqrt(2 / (C_out * K * 1)); bias = 0
    fan_out = C_out * K * 1
    std = np.sqrt(2.0 / fan_out)
    weight = jax.random.normal(k_w, (C_out, C_in, K, 1), dtype=jnp.float32) * std
    bias = jnp.zeros((C_out,), jnp.float32)

    # bn_init(bn, 1): gamma = 1, beta = 0; running stats at init: mean = 0, var = 1
    bn_gamma = jnp.ones((C_out,), jnp.float32)
    bn_beta = jnp.zeros((C_out,), jnp.float32)
    bn_mean = jnp.zeros((C_out,), jnp.float32)
    bn_var = jnp.ones((C_out,), jnp.float32)

    # exercise both stride=1 and stride=2 paths
    for stride in (1, 2):
        fwd = jax.jit(functools.partial(unit_tcn_forward, kernel_size=K, stride=stride))
        out = fwd(x, weight, bias, bn_gamma, bn_beta, bn_mean, bn_var)
        out = jax.block_until_ready(out)
        ref = _reference(x, weight, bias, bn_gamma, bn_beta, bn_mean, bn_var,
                         kernel_size=K, stride=stride)
        # bf16 inputs (f32 accumulation) vs f32 reference -> loose-ish tolerance
        np.testing.assert_allclose(np.asarray(out), np.asarray(ref), rtol=3e-2, atol=3e-2)

    print("KERNEL_OK")
</pallas_src>

<mosaic_0001>
module attributes {stable_mosaic.version = 11 : i64} {
  func.func @_tcn_kernel(%arg0: i32, %arg1: i32, %arg2: memref<1x320x4xbf16, #tpu.memory_space<vmem>>, %arg3: memref<5x4x128xbf16, #tpu.memory_space<vmem>>, %arg4: memref<1x128xf32, #tpu.memory_space<vmem>>, %arg5: memref<1x256x128xf32, #tpu.memory_space<vmem>>) attributes {dimension_semantics = [#tpu.dimension_semantics<parallel>, #tpu.dimension_semantics<parallel>], iteration_bounds = array<i64: 2, 1>, scalar_prefetch = 0 : i64, scratch_operands = 0 : i64, tpu.core_type = #tpu.core_type<tc>, window_params = [{transform_indices = @transform_0, window_bounds = array<i64: 1, 320, 4>}, {pipeline_mode = #tpu.pipeline_mode<synchronous>, transform_indices = @transform_1, window_bounds = array<i64: 5, 4, 128>}, {pipeline_mode = #tpu.pipeline_mode<synchronous>, transform_indices = @transform_2, window_bounds = array<i64: 1, 128>}, {transform_indices = @transform_3, window_bounds = array<i64: 1, 256, 128>}]} {
    %c16_i32 = arith.constant 16 : i32
    %0 = arith.muli %arg1, %c16_i32 : i32
    %cst = arith.constant 0.000000e+00 : f32
    %1 = vector.broadcast %cst : f32 to vector<256x128xf32>
    %c0_i32 = arith.constant 0 : i32
    %2 = arith.addi %0, %c0_i32 : i32
    %c16_i32_0 = arith.constant 16 : i32
    %3 = arith.muli %2, %c16_i32_0 : i32
    %4 = tpu.assume_multiple %3, 8 : i32
    %c0 = arith.constant 0 : index
    %5 = arith.index_cast %4 : i32 to index
    %c0_1 = arith.constant 0 : index
    %6 = vector.load %arg2[%c0, %5, %c0_1] : memref<1x320x4xbf16, #tpu.memory_space<vmem>>, vector<1x256x4xbf16>
    %7 = vector.shape_cast %6 : vector<1x256x4xbf16> to vector<256x4xbf16>
    %c0_2 = arith.constant 0 : index
    %c0_3 = arith.constant 0 : index
    %c0_4 = arith.constant 0 : index
    %8 = vector.load %arg3[%c0_2, %c0_3, %c0_4] : memref<5x4x128xbf16, #tpu.memory_space<vmem>>, vector<1x4x128xbf16>
    %9 = vector.shape_cast %8 : vector<1x4x128xbf16> to vector<4x128xbf16>
    %cst_5 = arith.constant dense<0.000000e+00> : vector<256x128xf32>
    %10 = tpu.matmul %7, %9, %cst_5 {dimension_numbers = #tpu.dot_dimension_numbers<[1], [0], [0], [1], [0, 0, 1, 1], [], []>} : vector<256x4xbf16>, vector<4x128xbf16>, vector<256x128xf32> -> vector<256x128xf32>
    %11 = arith.addf %1, %10 : vector<256x128xf32>
    %c1_i32 = arith.constant 1 : i32
    %12 = arith.addi %0, %c1_i32 : i32
    %c16_i32_6 = arith.constant 16 : i32
    %13 = arith.muli %12, %c16_i32_6 : i32
    %14 = tpu.assume_multiple %13, 8 : i32
    %c0_7 = arith.constant 0 : index
    %15 = arith.index_cast %14 : i32 to index
    %c0_8 = arith.constant 0 : index
    %16 = vector.load %arg2[%c0_7, %15, %c0_8] : memref<1x320x4xbf16, #tpu.memory_space<vmem>>, vector<1x256x4xbf16>
    %17 = vector.shape_cast %16 : vector<1x256x4xbf16> to vector<256x4xbf16>
    %c1 = arith.constant 1 : index
    %c0_9 = arith.constant 0 : index
    %c0_10 = arith.constant 0 : index
    %18 = vector.load %arg3[%c1, %c0_9, %c0_10] : memref<5x4x128xbf16, #tpu.memory_space<vmem>>, vector<1x4x128xbf16>
    %19 = vector.shape_cast %18 : vector<1x4x128xbf16> to vector<4x128xbf16>
    %cst_11 = arith.constant dense<0.000000e+00> : vector<256x128xf32>
    %20 = tpu.matmul %17, %19, %cst_11 {dimension_numbers = #tpu.dot_dimension_numbers<[1], [0], [0], [1], [0, 0, 1, 1], [], []>} : vector<256x4xbf16>, vector<4x128xbf16>, vector<256x128xf32> -> vector<256x128xf32>
    %21 = arith.addf %11, %20 : vector<256x128xf32>
    %c2_i32 = arith.constant 2 : i32
    %22 = arith.addi %0, %c2_i32 : i32
    %c16_i32_12 = arith.constant 16 : i32
    %23 = arith.muli %22, %c16_i32_12 : i32
    %24 = tpu.assume_multiple %23, 8 : i32
    %c0_13 = arith.constant 0 : index
    %25 = arith.index_cast %24 : i32 to index
    %c0_14 = arith.constant 0 : index
    %26 = vector.load %arg2[%c0_13, %25, %c0_14] : memref<1x320x4xbf16, #tpu.memory_space<vmem>>, vector<1x256x4xbf16>
    %27 = vector.shape_cast %26 : vector<1x256x4xbf16> to vector<256x4xbf16>
    %c2 = arith.constant 2 : index
    %c0_15 = arith.constant 0 : index
    %c0_16 = arith.constant 0 : index
    %28 = vector.load %arg3[%c2, %c0_15, %c0_16] : memref<5x4x128xbf16, #tpu.memory_space<vmem>>, vector<1x4x128xbf16>
    %29 = vector.shape_cast %28 : vector<1x4x128xbf16> to vector<4x128xbf16>
    %cst_17 = arith.constant dense<0.000000e+00> : vector<256x128xf32>
    %30 = tpu.matmul %27, %29, %cst_17 {dimension_numbers = #tpu.dot_dimension_numbers<[1], [0], [0], [1], [0, 0, 1, 1], [], []>} : vector<256x4xbf16>, vector<4x128xbf16>, vector<256x128xf32> -> vector<256x128xf32>
    %31 = arith.addf %21, %30 : vector<256x128xf32>
    %c3_i32 = arith.constant 3 : i32
    %32 = arith.addi %0, %c3_i32 : i32
    %c16_i32_18 = arith.constant 16 : i32
    %33 = arith.muli %32, %c16_i32_18 : i32
    %34 = tpu.assume_multiple %33, 8 : i32
    %c0_19 = arith.constant 0 : index
    %35 = arith.index_cast %34 : i32 to index
    %c0_20 = arith.constant 0 : index
    %36 = vector.load %arg2[%c0_19, %35, %c0_20] : memref<1x320x4xbf16, #tpu.memory_space<vmem>>, vector<1x256x4xbf16>
    %37 = vector.shape_cast %36 : vector<1x256x4xbf16> to vector<256x4xbf16>
    %c3 = arith.constant 3 : index
    %c0_21 = arith.constant 0 : index
    %c0_22 = arith.constant 0 : index
    %38 = vector.load %arg3[%c3, %c0_21, %c0_22] : memref<5x4x128xbf16, #tpu.memory_space<vmem>>, vector<1x4x128xbf16>
    %39 = vector.shape_cast %38 : vector<1x4x128xbf16> to vector<4x128xbf16>
    %cst_23 = arith.constant dense<0.000000e+00> : vector<256x128xf32>
    %40 = tpu.matmul %37, %39, %cst_23 {dimension_numbers = #tpu.dot_dimension_numbers<[1], [0], [0], [1], [0, 0, 1, 1], [], []>} : vector<256x4xbf16>, vector<4x128xbf16>, vector<256x128xf32> -> vector<256x128xf32>
    %41 = arith.addf %31, %40 : vector<256x128xf32>
    %c4_i32 = arith.constant 4 : i32
    %42 = arith.addi %0, %c4_i32 : i32
    %c16_i32_24 = arith.constant 16 : i32
    %43 = arith.muli %42, %c16_i32_24 : i32
    %44 = tpu.assume_multiple %43, 8 : i32
    %c0_25 = arith.constant 0 : index
    %45 = arith.index_cast %44 : i32 to index
    %c0_26 = arith.constant 0 : index
    %46 = vector.load %arg2[%c0_25, %45, %c0_26] : memref<1x320x4xbf16, #tpu.memory_space<vmem>>, vector<1x256x4xbf16>
    %47 = vector.shape_cast %46 : vector<1x256x4xbf16> to vector<256x4xbf16>
    %c4 = arith.constant 4 : index
    %c0_27 = arith.constant 0 : index
    %c0_28 = arith.constant 0 : index
    %48 = vector.load %arg3[%c4, %c0_27, %c0_28] : memref<5x4x128xbf16, #tpu.memory_space<vmem>>, vector<1x4x128xbf16>
    %49 = vector.shape_cast %48 : vector<1x4x128xbf16> to vector<4x128xbf16>
    %cst_29 = arith.constant dense<0.000000e+00> : vector<256x128xf32>
    %50 = tpu.matmul %47, %49, %cst_29 {dimension_numbers = #tpu.dot_dimension_numbers<[1], [0], [0], [1], [0, 0, 1, 1], [], []>} : vector<256x4xbf16>, vector<4x128xbf16>, vector<256x128xf32> -> vector<256x128xf32>
    %51 = arith.addf %41, %50 : vector<256x128xf32>
    %c0_30 = arith.constant 0 : index
    %c0_31 = arith.constant 0 : index
    %52 = vector.load %arg4[%c0_30, %c0_31] : memref<1x128xf32, #tpu.memory_space<vmem>>, vector<1x128xf32>
    %53 = vector.broadcast %52 : vector<1x128xf32> to vector<256x128xf32>
    %54 = arith.addf %51, %53 : vector<256x128xf32>
    %c0_32 = arith.constant 0 : index
    %c0_33 = arith.constant 0 : index
    %c0_34 = arith.constant 0 : index
    %55 = vector.load %arg5[%c0_32, %c0_33, %c0_34] : memref<1x256x128xf32, #tpu.memory_space<vmem>>, vector<1x256x128xf32>
    %56 = vector.shape_cast %55 : vector<1x256x128xf32> to vector<256x128xf32>
    %57 = vector.shape_cast %54 : vector<256x128xf32> to vector<1x256x128xf32>
    tpu.vector_store %arg5[%c0_32, %c0_33, %c0_34], %57 {strides = array<i32>} : memref<1x256x128xf32, #tpu.memory_space<vmem>>, vector<1x256x128xf32>,
    return
  }
  func.func @transform_0(%arg0: i32, %arg1: i32) -> (i32, i32, i32) {
    %c0_i32 = arith.constant 0 : i32
    %c0_i32_0 = arith.constant 0 : i32
    %c0_i32_1 = arith.constant 0 : i32
    return %arg0, %c0_i32, %c0_i32_0 : i32, i32, i32
  }
  func.func @transform_1(%arg0: i32, %arg1: i32) -> (i32, i32, i32) {
    %c0_i32 = arith.constant 0 : i32
    %c0_i32_0 = arith.constant 0 : i32
    %c0_i32_1 = arith.constant 0 : i32
    %c0_i32_2 = arith.constant 0 : i32
    return %c0_i32, %c0_i32_0, %c0_i32_1 : i32, i32, i32
  }
  func.func @transform_2(%arg0: i32, %arg1: i32) -> (i32, i32) {
    %c0_i32 = arith.constant 0 : i32
    %c0_i32_0 = arith.constant 0 : i32
    %c0_i32_1 = arith.constant 0 : i32
    return %c0_i32, %c0_i32_0 : i32, i32
  }
  func.func @transform_3(%arg0: i32, %arg1: i32) -> (i32, i32, i32) {
    %c0_i32 = arith.constant 0 : i32
    %c0_i32_0 = arith.constant 0 : i32
    return %arg0, %arg1, %c0_i32 : i32, i32, i32
  }
}

</mosaic_0001>

<llo_original>
// kernel: unit_tcn_forward.1
$region0: #{unit_tcn_forward.1}
  #allocation0 [shape = 'u32[]', space=smem, size = 0x4, offset = 0x4, fixed_abs, tag = 'smem constant byte address 0x4 - core index']
  #allocation1 [shape = 'u32[144,128]{1,0:T(1,128)}', space=vmem, size = 0x12000, scoped, tag = 'internal scratch']
  %s0 = inlined_call_operand.hbm [shape: bf16[2,320,4], index: 0, kind: input, shape index: {}]
  %s1 = inlined_call_operand.hbm [shape: bf16[5,4,128], index: 1, kind: input, shape index: {}]
  %s2 = inlined_call_operand.hbm [shape: f32[1,128], index: 2, kind: input, shape index: {}]
  %s3 = inlined_call_operand.hbm [shape: f32[2,256,128], index: 3, kind: output, shape index: {}]
  %s4 = sld [smem:[#allocation0]]
  $region57: #{unit_tcn_forward.1} parent=0
    _
  %s6 = ssub.s32 1, %s4
  %s7 = scalar_select 0, %s6, %s4
  $region1: #{unit_tcn_forward.1} parent=0
    #allocation2 [shape = 'u8[163840]{0}', space=vmem, size = 0x28000, scoped, tag = 'input window, operand 0']
    #allocation3 [shape = 's32[2]{0}', space=sflag, size = 0x8, scoped, tag = 'scoped memory for unit_tcn_forward.1']
    #allocation4 [shape = 's32[2]{0}', space=sflag, size = 0x8, scoped, tag = 'scoped memory for unit_tcn_forward.1']
    #allocation5 [shape = 'u8[5120]{0}', space=vmem, size = 0x1400, scoped, tag = 'input window, operand 1, single buffered']
    #allocation6 [shape = 's32[1]{0}', space=sflag, size = 0x4, scoped, tag = 'scoped memory for unit_tcn_forward.1']
    #allocation7 [shape = 'u8[512]{0}', space=vmem, size = 0x400, scoped, tag = 'input window, operand 2, single buffered']
    #allocation8 [shape = 'u8[262144]{0}', space=vmem, size = 0x40000, scoped, tag = 'output window, operand 0']
    %8 = vsyncpa [#allocation3], 0
    %s9 = scalar_lea.sflag [#allocation3], 1
    %10 = vsyncpa %s9, 0
    %11 = vsyncpa [#allocation6], 0
    %12 = vsyncpa [#allocation4], 0
    %s13 = scalar_lea.sflag [#allocation4], 1
    %14 = vsyncpa %s13, 0
    loop: start=0, step=1, limit=4
    $region2: #{unit_tcn_forward.1} parent=1 // loop_pre_header
      _
    $region3: #{unit_tcn_forward.1} parent=1 // loop_header
      %s16 = sphi 0, %s20
      %p17 = scmp.ge.s32.totalorder %s16, 4
      %s23 = sphi 0, %s35
      %s24 = sphi 0, %s31
      %s25 = sphi 0, %s23
      %s26 = sphi 0, %s24
      %s27 = sphi 0, %s25
      %s28 = sphi 0, %s26
      %s38 = sphi 0, %s40
      %s41 = sphi 0, %s38
      %s42 = sphi 0, %s41
      %s58 = sphi 0, %s42
      %s62 = sphi 0, %s62
      %s64 = sphi 0, %s62
      %s65 = sphi 0, %s64
      %s79 = sphi 0, %s65
      %s83 = sphi 0, %s83
      %s85 = sphi 0, %s83
      %s86 = sphi 0, %s85
      %s100 = sphi 0, %s86
      %s108 = sphi 0, %s110
      %s111 = sphi 0, %s108
      %s112 = sphi 0, %s111
      %s128 = sphi 0, %s112
    $region4: #{unit_tcn_forward.1} parent=1 // loop_header_branch
      %19 = sbr.rel (%p17) target = $region8
    $region5: #{unit_tcn_forward.1} parent=1 // loop_body
      %s21 = ssub.s32 %s16, 1
      %s22 = ssub.s32 %s16, 2
      %s29 = sadd.s32 1, %s24
      %p30 = scmp.ge.s32.totalorder %s29, 1
      %s31 = scalar_select %p30, 0, %s29
      %s32 = sadd.s32 1, %s23
      %s33 = scalar_select %p30, %s32, %s23
      %p34 = scmp.ge.s32.totalorder %s33, 2
      %s35 = scalar_select %p34, 0, %s33
      %s36 = ssub.s32 %s23, %s35
      %p37 = scmp.eq.s32.totalorder %s36, 0
      %s39 = sadd.s32 %s38, 1
      %s40 = scalar_select %p37, %s38, %s39
      %p43 = pneg %p37
      %p44 = scmp.eq.s32.totalorder %s16, 1
      %p45 = por %p43, %p44
      %p46 = scmp.ne.s32.totalorder %s38, %s41
      %p47 = scmp.eq.s32.totalorder %s16, 0
      %p48 = por %p46, %p47
      %p49 = scmp.ne.s32.totalorder %s38, %s41
      %p50 = scmp.eq.s32.totalorder %s21, 1
      %p51 = por %p49, %p50
      %p52 = scmp.ne.s32.totalorder %s41, %s42
      %p53 = scmp.eq.s32.totalorder %s21, 0
      %p54 = por %p52, %p53
      %p55 = scmp.ne.s32.totalorder %s41, %s42
      %p56 = scmp.eq.s32.totalorder %s22, 1
      %p57 = por %p55, %p56
      %p59 = scmp.ne.s32.totalorder %s42, %s58
      %p60 = scmp.eq.s32.totalorder %s22, 0
      %p61 = por %p59, %p60
      %s63 = sadd.s32 %s62, 1
      %p66 = scmp.eq.s32.totalorder %s16, 1
      %p67 = scmp.ne.s32.totalorder %s62, %s64
      %p68 = scmp.eq.s32.totalorder %s16, 0
      %p69 = por %p67, %p68
      %p70 = scmp.ne.s32.totalorder %s62, %s64
      %p71 = scmp.eq.s32.totalorder %s21, 1
      %p72 = por %p70, %p71
      %p73 = scmp.ne.s32.totalorder %s64, %s65
      %p74 = scmp.eq.s32.totalorder %s21, 0
      %p75 = por %p73, %p74
      %p76 = scmp.ne.s32.totalorder %s64, %s65
      %p77 = scmp.eq.s32.totalorder %s22, 1
      %p78 = por %p76, %p77
      %p80 = scmp.ne.s32.totalorder %s65, %s79
      %p81 = scmp.eq.s32.totalorder %s22, 0
      %p82 = por %p80, %p81
      %s84 = sadd.s32 %s83, 1
      %p87 = scmp.eq.s32.totalorder %s16, 1
      %p88 = scmp.ne.s32.totalorder %s83, %s85
      %p89 = scmp.eq.s32.totalorder %s16, 0
      %p90 = por %p88, %p89
      %p91 = scmp.ne.s32.totalorder %s83, %s85
      %p92 = scmp.eq.s32.totalorder %s21, 1
      %p93 = por %p91, %p92
      %p94 = scmp.ne.s32.totalorder %s85, %s86
      %p95 = scmp.eq.s32.totalorder %s21, 0
      %p96 = por %p94, %p95
      %p97 = scmp.ne.s32.totalorder %s85, %s86
      %p98 = scmp.eq.s32.totalorder %s22, 1
      %p99 = por %p97, %p98
      %p101 = scmp.ne.s32.totalorder %s86, %s100
      %p102 = scmp.eq.s32.totalorder %s22, 0
      %p103 = por %p101, %p102
      %s104 = ssub.s32 %s23, %s35
      %s105 = ssub.s32 %s24, %s31
      %s106 = sor.u32 %s104, %s105
      %p107 = scmp.eq.s32.totalorder %s106, 0
      %s109 = sadd.s32 %s108, 1
      %s110 = scalar_select %p107, %s108, %s109
      %p113 = pneg %p107
      %p114 = scmp.eq.s32.totalorder %s16, 1
      %p115 = por %p113, %p114
      %p116 = scmp.ne.s32.totalorder %s108, %s111
      %p117 = scmp.eq.s32.totalorder %s16, 0
      %p118 = por %p116, %p117
      %p119 = scmp.ne.s32.totalorder %s108, %s111
      %p120 = scmp.eq.s32.totalorder %s21, 1
      %p121 = por %p119, %p120
      %p122 = scmp.ne.s32.totalorder %s111, %s112
      %p123 = scmp.eq.s32.totalorder %s21, 0
      %p124 = por %p122, %p123
      %p125 = scmp.ne.s32.totalorder %s111, %s112
      %p126 = scmp.eq.s32.totalorder %s22, 1
      %p127 = por %p125, %p126
      %p129 = scmp.ne.s32.totalorder %s112, %s128
      %p130 = scmp.eq.s32.totalorder %s22, 0
      %p131 = por %p129, %p130
      %p132 = scmp.le.s32.totalorder 1, %s16
      %p133 = scmp.lt.s32.totalorder %s16, 3
      %p134 = pnand %p132, %p133
      %p135 = pneg %p134
      // Predicated region
      $region9: #{unit_tcn_forward.1} parent=5 // pred_check
        _
      $region10: #{unit_tcn_forward.1} parent=5 // pred_check_branch
        %137 = sbr.rel (%p134) target = $region12
      $region11: #{unit_tcn_forward.1} parent=5 // pred_region
        %s138 = ssub.s32 %s16, 1
        // Predicated region
        $region13: #{unit_tcn_forward.1} parent=11 // pred_check
          %p139 = pneg %p75
        $region14: #{unit_tcn_forward.1} parent=11 // pred_check_branch
          %141 = sbr.rel (%p139) target = $region16
        $region15: #{unit_tcn_forward.1} parent=11 // pred_region
          %s143 = ssub.s32 160, 160
          %144 = vsyncadd [#allocation6], %s143
          %s145 = sshll.u32 [#allocation5], 4
          %s146 = int_to_ptr.vmem [resolvable:$true] %s145
          %151 = dma.hbm_to_vmem [thread:$0]  %s1, 160, %s146, [#allocation6], 32, 32, 2
        $region16: #{unit_tcn_forward.1} parent=11 // pred_fallthru
          _
        // Predicated region
        $region17: #{unit_tcn_forward.1} parent=11 // pred_check
          %p152 = pneg %p96
        $region18: #{unit_tcn_forward.1} parent=11 // pred_check_branch
          %154 = sbr.rel (%p152) target = $region20
        $region19: #{unit_tcn_forward.1} parent=11 // pred_region
          %s156 = ssub.s32 16, 16
          %157 = vsyncadd [#allocation6], %s156
          %s159 = sshll.u32 [#allocation7], 4
          %s160 = int_to_ptr.vmem [resolvable:$true] %s159
          %162 = dma.hbm_to_vmem [thread:$0]  %s2, 16, %s160, [#allocation6]
        $region20: #{unit_tcn_forward.1} parent=11 // pred_fallthru
          _
      $region12: #{unit_tcn_forward.1} parent=5 // pred_fallthru
        _
      %p163 = scmp.lt.s32.totalorder %s16, 2
      // Predicated region
      $region21: #{unit_tcn_forward.1} parent=5 // pred_check
        %p164 = pneg %p163
      $region22: #{unit_tcn_forward.1} parent=5 // pred_check_branch
        %166 = sbr.rel (%p164) target = $region24
      $region23: #{unit_tcn_forward.1} parent=5 // pred_region
        // Predicated region
        $region25: #{unit_tcn_forward.1} parent=23 // pred_check
          %p167 = pneg %p48
        $region26: #{unit_tcn_forward.1} parent=23 // pred_check_branch
          %169 = sbr.rel (%p167) target = $region28
        $region27: #{unit_tcn_forward.1} parent=23 // pred_region
          %s170 = sand.u32 %s38, 1
          %s171 = scalar_lea.sflag [#allocation3], %s170
          %s172 = sand.u32 %s38, 1
          %s173 = smul.addr %s172, 160
          %s174 = scalar_lea.vmem [#allocation2], %s173
          %s176 = ssub.s32 2560, 2560
          %177 = vsyncadd %s171, %s176
          %s178 = smul.addr %s23, 40
          %s179 = smul.addr %s178, 64
          %s180 = scalar_lea.hbm %s0, %s179
          %s181 = sshll.u32 %s174, 4
          %s182 = int_to_ptr.vmem [resolvable:$true] %s181
          %187 = dma.hbm_to_vmem [thread:$0]  %s180, 2560, %s182, %s171, 64, 64, 4
        $region28: #{unit_tcn_forward.1} parent=23 // pred_fallthru
          _
      $region24: #{unit_tcn_forward.1} parent=5 // pred_fallthru
        _
      %p188 = scmp.le.s32.totalorder 1, %s16
      %p189 = scmp.lt.s32.totalorder %s16, 3
      %p190 = pnand %p188, %p189
      %p191 = pneg %p190
      // Predicated region
      $region29: #{unit_tcn_forward.1} parent=5 // pred_check
        _
      $region30: #{unit_tcn_forward.1} parent=5 // pred_check_branch
        %193 = sbr.rel (%p190) target = $region32
      $region31: #{unit_tcn_forward.1} parent=5 // pred_region
        %s194 = ssub.s32 %s16, 1
        %s195 = sand.u32 %s41, 1
        %s196 = scalar_lea.sflag [#allocation3], %s195
        %s197 = sand.u32 %s41, 1
        %s198 = smul.addr %s197, 160
        %s199 = scalar_lea.vmem [#allocation2], %s198
        // Predicated region
        $region33: #{unit_tcn_forward.1} parent=31 // pred_check
          %p200 = pneg %p54
        $region34: #{unit_tcn_forward.1} parent=31 // pred_check_branch
          %202 = sbr.rel (%p200) target = $region36
        $region35: #{unit_tcn_forward.1} parent=31 // pred_region
          %203 = dma.done %s196, 2560
        $region36: #{unit_tcn_forward.1} parent=31 // pred_fallthru
          _
        // Predicated region
        $region37: #{unit_tcn_forward.1} parent=31 // pred_check
          %p204 = pneg %p75
        $region38: #{unit_tcn_forward.1} parent=31 // pred_check_branch
          %206 = sbr.rel (%p204) target = $region40
        $region39: #{unit_tcn_forward.1} parent=31 // pred_region
          %207 = dma.done [#allocation6], 160
        $region40: #{unit_tcn_forward.1} parent=31 // pred_fallthru
          _
        // Predicated region
        $region41: #{unit_tcn_forward.1} parent=31 // pred_check
          %p208 = pneg %p96
        $region42: #{unit_tcn_forward.1} parent=31 // pred_check_branch
          %210 = sbr.rel (%p208) target = $region44
        $region43: #{unit_tcn_forward.1} parent=31 // pred_region
          %211 = dma.done [#allocation6], 16
        $region44: #{unit_tcn_forward.1} parent=31 // pred_fallthru
          _
        %s212 = sand.u32 %s41, 1
        %s213 = scalar_lea.sflag [#allocation3], %s212
        %s214 = sand.u32 %s41, 1
        %s215 = smul.addr %s214, 160
        %s216 = scalar_lea.vmem [#allocation2], %s215
        %p217 = pneg %p54
        %p218 = pneg %p51
        %p219 = pneg %p75
        %p220 = pneg %p72
        %p221 = pneg %p96
        %p222 = pneg %p93
        %p223 = pneg %p124
        %p224 = pneg %p121
        %s225 = sand.u32 %s111, 1
        %s226 = scalar_lea.sflag [#allocation4], %s225
        %s227 = sand.u32 %s111, 1
        %s228 = smul.addr %s227, 256
        %s229 = scalar_lea.vmem [#allocation8], %s228
        %s230 = smul.u32 32, %s26
        %s232 = smul.u32 %s26, 16
        %s233 = smul.u32 %s26, 256
        %s234 = sshra.s32 %s233, 3
        %s235 = sand.u32 %s233, 7
        %s236 = smul.addr %s234, 4
        %s237 = scalar_lea.vmem %s199, %s236 [#allocation2]
        %v238 = vld [vmem:[%s237] sm:$0xf]
        %v239 = vld [vmem:[%s237 + $0x4] sm:$0xf]
        %v240 = vld [vmem:[%s237 + $0x8] sm:$0xf]
        %v241 = vld [vmem:[%s237 + $0xc] sm:$0xf]
        %v242 = vld [vmem:[%s237 + $0x10] sm:$0xf]
        %v243 = vld [vmem:[%s237 + $0x14] sm:$0xf]
        %v244 = vld [vmem:[%s237 + $0x18] sm:$0xf]
        %v245 = vld [vmem:[%s237 + $0x1c] sm:$0xf]
        %v246 = vld [vmem:[%s237 + $0x20] sm:$0xf]
        %v247 = vld [vmem:[%s237 + $0x24] sm:$0xf]
        %v248 = vld [vmem:[%s237 + $0x28] sm:$0xf]
        %v249 = vld [vmem:[%s237 + $0x2c] sm:$0xf]
        %v250 = vld [vmem:[%s237 + $0x30] sm:$0xf]
        %v251 = vld [vmem:[%s237 + $0x34] sm:$0xf]
        %v252 = vld [vmem:[%s237 + $0x38] sm:$0xf]
        %v253 = vld [vmem:[%s237 + $0x3c] sm:$0xf]
        %v254 = vld [vmem:[%s237 + $0x40] sm:$0xf]
        %v255 = vld [vmem:[%s237 + $0x44] sm:$0xf]
        %v256 = vld [vmem:[%s237 + $0x48] sm:$0xf]
        %v257 = vld [vmem:[%s237 + $0x4c] sm:$0xf]
        %v258 = vld [vmem:[%s237 + $0x50] sm:$0xf]
        %v259 = vld [vmem:[%s237 + $0x54] sm:$0xf]
        %v260 = vld [vmem:[%s237 + $0x58] sm:$0xf]
        %v261 = vld [vmem:[%s237 + $0x5c] sm:$0xf]
        %v262 = vld [vmem:[%s237 + $0x60] sm:$0xf]
        %v263 = vld [vmem:[%s237 + $0x64] sm:$0xf]
        %v264 = vld [vmem:[%s237 + $0x68] sm:$0xf]
        %v265 = vld [vmem:[%s237 + $0x6c] sm:$0xf]
        %v266 = vld [vmem:[%s237 + $0x70] sm:$0xf]
        %v267 = vld [vmem:[%s237 + $0x74] sm:$0xf]
        %v268 = vld [vmem:[%s237 + $0x78] sm:$0xf]
        %v269 = vld [vmem:[%s237 + $0x7c] sm:$0xf]
        %v270 = vld [vmem:[#allocation5] sm:$0x3]
        %s271 = sadd.s32 %s232, 1
        %s272 = smul.u32 %s271, 16
        %s273 = sshra.s32 %s272, 3
        %s274 = sand.u32 %s272, 7
        %s275 = smul.addr %s273, 4
        %s276 = scalar_lea.vmem %s199, %s275 [#allocation2]
        %v277 = vld [vmem:[%s276] sm:$0xf]
        %v278 = vld [vmem:[%s276 + $0x4] sm:$0xf]
        %v279 = vld [vmem:[%s276 + $0x8] sm:$0xf]
        %v280 = vld [vmem:[%s276 + $0xc] sm:$0xf]
        %v281 = vld [vmem:[%s276 + $0x10] sm:$0xf]
        %v282 = vld [vmem:[%s276 + $0x14] sm:$0xf]
        %v283 = vld [vmem:[%s276 + $0x18] sm:$0xf]
        %v284 = vld [vmem:[%s276 + $0x1c] sm:$0xf]
        %v285 = vld [vmem:[%s276 + $0x20] sm:$0xf]
        %v286 = vld [vmem:[%s276 + $0x24] sm:$0xf]
        %v287 = vld [vmem:[%s276 + $0x28] sm:$0xf]
        %v288 = vld [vmem:[%s276 + $0x2c] sm:$0xf]
        %v289 = vld [vmem:[%s276 + $0x30] sm:$0xf]
        %v290 = vld [vmem:[%s276 + $0x34] sm:$0xf]
        %v291 = vld [vmem:[%s276 + $0x38] sm:$0xf]
        %v292 = vld [vmem:[%s276 + $0x3c] sm:$0xf]
        %v293 = vld [vmem:[%s276 + $0x40] sm:$0xf]
        %v294 = vld [vmem:[%s276 + $0x44] sm:$0xf]
        %v295 = vld [vmem:[%s276 + $0x48] sm:$0xf]
        %v296 = vld [vmem:[%s276 + $0x4c] sm:$0xf]
        %v297 = vld [vmem:[%s276 + $0x50] sm:$0xf]
        %v298 = vld [vmem:[%s276 + $0x54] sm:$0xf]
        %v299 = vld [vmem:[%s276 + $0x58] sm:$0xf]
        %v300 = vld [vmem:[%s276 + $0x5c] sm:$0xf]
        %v301 = vld [vmem:[%s276 + $0x60] sm:$0xf]
        %v302 = vld [vmem:[%s276 + $0x64] sm:$0xf]
        %v303 = vld [vmem:[%s276 + $0x68] sm:$0xf]
        %v304 = vld [vmem:[%s276 + $0x6c] sm:$0xf]
        %v305 = vld [vmem:[%s276 + $0x70] sm:$0xf]
        %v306 = vld [vmem:[%s276 + $0x74] sm:$0xf]
        %v307 = vld [vmem:[%s276 + $0x78] sm:$0xf]
        %v308 = vld [vmem:[%s276 + $0x7c] sm:$0xf]
        %s309 = scalar_lea.vmem [#allocation5], 2
        %v310 = vld [vmem:[%s309] sm:$0x3]
        %v343 = vunpack.c.l.b16 %v277
        %v344 = vunpack.c.l.b16 %v278
        %v345 = vunpack.c.l.b16 %v279
        %v346 = vunpack.c.l.b16 %v280
        %v347 = vunpack.c.l.b16 %v281
        %v348 = vunpack.c.l.b16 %v282
        %v349 = vunpack.c.l.b16 %v283
        %v350 = vunpack.c.l.b16 %v284
        %v351 = vunpack.c.l.b16 %v285
        %v352 = vunpack.c.l.b16 %v286
        %v353 = vunpack.c.l.b16 %v287
        %v354 = vunpack.c.l.b16 %v288
        %v355 = vunpack.c.l.b16 %v289
        %v356 = vunpack.c.l.b16 %v290
        %v357 = vunpack.c.l.b16 %v291
        %v358 = vunpack.c.l.b16 %v292
        %v359 = vunpack.c.l.b16 %v293
        %v360 = vunpack.c.l.b16 %v294
        %v361 = vunpack.c.l.b16 %v295
        %v362 = vunpack.c.l.b16 %v296
        %v363 = vunpack.c.l.b16 %v297
        %v364 = vunpack.c.l.b16 %v298
        %v365 = vunpack.c.l.b16 %v299
        %v366 = vunpack.c.l.b16 %v300
        %v367 = vunpack.c.l.b16 %v301
        %v368 = vunpack.c.l.b16 %v302
        %v369 = vunpack.c.l.b16 %v303
        %v370 = vunpack.c.l.b16 %v304
        %v371 = vunpack.c.l.b16 %v305
        %v372 = vunpack.c.l.b16 %v306
        %v373 = vunpack.c.l.b16 %v307
        %v374 = vunpack.c.l.b16 %v308
        %v375 = vpack.c.b16 %v344, %v343
        %v376 = vpack.c.b16 %v346, %v345
        %v377 = vpack.c.b16 %v348, %v347
        %v378 = vpack.c.b16 %v350, %v349
        %v379 = vpack.c.b16 %v352, %v351
        %v380 = vpack.c.b16 %v354, %v353
        %v381 = vpack.c.b16 %v356, %v355
        %v382 = vpack.c.b16 %v358, %v357
        %v383 = vpack.c.b16 %v360, %v359
        %v384 = vpack.c.b16 %v362, %v361
        %v385 = vpack.c.b16 %v364, %v363
        %v386 = vpack.c.b16 %v366, %v365
        %v387 = vpack.c.b16 %v368, %v367
        %v388 = vpack.c.b16 %v370, %v369
        %v389 = vpack.c.b16 %v372, %v371
        %v390 = vpack.c.b16 %v374, %v373
        %vm391 = vcmask 31744
        %v393 = vsel %vm391, %v375, 0
        %v396 = vsel %vm391, %v376, 0
        %v399 = vsel %vm391, %v377, 0
        %v402 = vsel %vm391, %v378, 0
        %v405 = vsel %vm391, %v379, 0
        %v408 = vsel %vm391, %v380, 0
        %v411 = vsel %vm391, %v381, 0
        %v414 = vsel %vm391, %v382, 0
        %v417 = vsel %vm391, %v383, 0
        %v420 = vsel %vm391, %v384, 0
        %v423 = vsel %vm391, %v385, 0
        %v426 = vsel %vm391, %v386, 0
        %v429 = vsel %vm391, %v387, 0
        %v432 = vsel %vm391, %v388, 0
        %v435 = vsel %vm391, %v389, 0
        %v438 = vsel %vm391, %v390, 0
        %vm440 = vcmask 1041408
        %v442 = vsel %vm440, %v310, 0
        %444 = vmatprep.subr.bf16.mxu0 0
        %445 = vmatpush1.bf16.msra.mxu0 %v442
        %446 = vmatprep.subr.bf16.mxu0 0
        %447 = vmatpush1.bf16.msra.mxu0 0
        %448 = vmatprep.subr.bf16.mxu0 0
        %449 = vmatpush1.bf16.msra.mxu0 0
        %450 = vmatprep.subr.bf16.mxu0 0
        %451 = vmatpush1.bf16.msra.mxu0 0
        %452 = vmatprep.subr.bf16.mxu0 0
        %453 = vmatpush1.bf16.msra.mxu0 0
        %454 = vmatprep.subr.bf16.mxu0 0
        %455 = vmatpush1.bf16.msra.mxu0 0
        %456 = vmatprep.subr.bf16.mxu0 0
        %457 = vmatpush1.bf16.msra.mxu0 0
        %458 = vmatprep.subr.bf16.mxu0 0
        %459 = vmatpush1.bf16.msra.mxu0 0
        %460 = vmatprep.subr.bf16.mxu0 0
        %461 = vmatpush1.bf16.msra.mxu0 0
        %462 = vmatprep.subr.bf16.mxu0 0
        %463 = vmatpush1.bf16.msra.mxu0 0
        %464 = vmatprep.subr.bf16.mxu0 0
        %465 = vmatpush1.bf16.msra.mxu0 0
        %466 = vmatprep.subr.bf16.mxu0 0
        %467 = vmatpush1.bf16.msra.mxu0 0
        %468 = vmatprep.subr.bf16.mxu0 0
        %469 = vmatpush1.bf16.msra.mxu0 0
        %470 = vmatprep.subr.bf16.mxu0 0
        %471 = vmatpush1.bf16.msra.mxu0 0
        %472 = vmatprep.subr.bf16.mxu0 0
        %473 = vmatpush1.bf16.msra.mxu0 0
        %474 = vmatprep.subr.bf16.mxu0 0
        %475 = vmatpush1.bf16.msra.mxu0 0
        %476 = vmatprep.mubr.bf16.mxu0 0
        %477 = vmatmul.mubr.bf16.gmra.mrb[0].mxu0 %v393
        %v478 = vpop.f32.mrb[0].mxu0
        %v479 = vadd.f32 0.0, %v478
        %v480 = vpop.f32.mrb[0].mxu0
        %v481 = vpop.f32.mrb[0].mxu0
        %v482 = vadd.f32 0.0, %v481
        %v483 = vpop.f32.mrb[0].mxu0
        %484 = vmatprep.mubr.bf16.mxu0 0
        %485 = vmatmul.mubr.bf16.gmra.mrb[0].mxu0 %v396
        %v486 = vpop.f32.mrb[0].mxu0
        %v487 = vadd.f32 0.0, %v486
        %v488 = vpop.f32.mrb[0].mxu0
        %v489 = vpop.f32.mrb[0].mxu0
        %v490 = vadd.f32 0.0, %v489
        %v491 = vpop.f32.mrb[0].mxu0
        %492 = vmatprep.mubr.bf16.mxu0 0
        %493 = vmatmul.mubr.bf16.gmra.mrb[0].mxu0 %v399
        %v494 = vpop.f32.mrb[0].mxu0
        %v495 = vadd.f32 0.0, %v494
        %v496 = vpop.f32.mrb[0].mxu0
        %v497 = vpop.f32.mrb[0].mxu0
        %v498 = vadd.f32 0.0, %v497
        %v499 = vpop.f32.mrb[0].mxu0
        %500 = vmatprep.mubr.bf16.mxu0 0
        %501 = vmatmul.mubr.bf16.gmra.mrb[0].mxu0 %v402
        %v502 = vpop.f32.mrb[0].mxu0
        %v503 = vadd.f32 0.0, %v502
        %v504 = vpop.f32.mrb[0].mxu0
        %v505 = vpop.f32.mrb[0].mxu0
        %v506 = vadd.f32 0.0, %v505
        %v507 = vpop.f32.mrb[0].mxu0
        %508 = vmatprep.mubr.bf16.mxu0 0
        %509 = vmatmul.mubr.bf16.gmra.mrb[0].mxu0 %v405
        %v510 = vpop.f32.mrb[0].mxu0
        %v511 = vadd.f32 0.0, %v510
        %v512 = vpop.f32.mrb[0].mxu0
        %v513 = vpop.f32.mrb[0].mxu0
        %v514 = vadd.f32 0.0, %v513
        %v515 = vpop.f32.mrb[0].mxu0
        %516 = vmatprep.mubr.bf16.mxu0 0
        %517 = vmatmul.mubr.bf16.gmra.mrb[0].mxu0 %v408
        %v518 = vpop.f32.mrb[0].mxu0
        %v519 = vadd.f32 0.0, %v518
        %v520 = vpop.f32.mrb[0].mxu0
        %v521 = vpop.f32.mrb[0].mxu0
        %v522 = vadd.f32 0.0, %v521
        %v523 = vpop.f32.mrb[0].mxu0
        %524 = vmatprep.mubr.bf16.mxu0 0
        %525 = vmatmul.mubr.bf16.gmra.mrb[0].mxu0 %v411
        %v526 = vpop.f32.mrb[0].mxu0
        %v527 = vadd.f32 0.0, %v526
        %v528 = vpop.f32.mrb[0].mxu0
        %v529 = vpop.f32.mrb[0].mxu0
        %v530 = vadd.f32 0.0, %v529
        %v531 = vpop.f32.mrb[0].mxu0
        %532 = vmatprep.mubr.bf16.mxu0 0
        %533 = vmatmul.mubr.bf16.gmra.mrb[0].mxu0 %v414
        %v534 = vpop.f32.mrb[0].mxu0
        %v535 = vadd.f32 0.0, %v534
        %v536 = vpop.f32.mrb[0].mxu0
        %v537 = vpop.f32.mrb[0].mxu0
        %v538 = vadd.f32 0.0, %v537
        %v539 = vpop.f32.mrb[0].mxu0
        %540 = vmatprep.mubr.bf16.mxu0 0
        %541 = vmatmul.mubr.bf16.gmra.mrb[0].mxu0 %v417
        %v542 = vpop.f32.mrb[0].mxu0
        %v543 = vadd.f32 0.0, %v542
        %v544 = vpop.f32.mrb[0].mxu0
        %v545 = vpop.f32.mrb[0].mxu0
        %v546 = vadd.f32 0.0, %v545
        %v547 = vpop.f32.mrb[0].mxu0
        %548 = vmatprep.mubr.bf16.mxu0 0
        %549 = vmatmul.mubr.bf16.gmra.mrb[0].mxu0 %v420
        %v550 = vpop.f32.mrb[0].mxu0
        %v551 = vadd.f32 0.0, %v550
        %v552 = vpop.f32.mrb[0].mxu0
        %v553 = vpop.f32.mrb[0].mxu0
        %v554 = vadd.f32 0.0, %v553
        %v555 = vpop.f32.mrb[0].mxu0
        %556 = vmatprep.mubr.bf16.mxu0 0
        %557 = vmatmul.mubr.bf16.gmra.mrb[0].mxu0 %v423
        %v558 = vpop.f32.mrb[0].mxu0
        %v559 = vadd.f32 0.0, %v558
        %v560 = vpop.f32.mrb[0].mxu0
        %v561 = vpop.f32.mrb[0].mxu0
        %v562 = vadd.f32 0.0, %v561
        %v563 = vpop.f32.mrb[0].mxu0
        %564 = vmatprep.mubr.bf16.mxu0 0
        %565 = vmatmul.mubr.bf16.gmra.mrb[0].mxu0 %v426
        %v566 = vpop.f32.mrb[0].mxu0
        %v567 = vadd.f32 0.0, %v566
        %v568 = vpop.f32.mrb[0].mxu0
        %v569 = vpop.f32.mrb[0].mxu0
        %v570 = vadd.f32 0.0, %v569
        %v571 = vpop.f32.mrb[0].mxu0
        %572 = vmatprep.mubr.bf16.mxu0 0
        %573 = vmatmul.mubr.bf16.gmra.mrb[0].mxu0 %v429
        %v574 = vpop.f32.mrb[0].mxu0
        %v575 = vadd.f32 0.0, %v574
        %v576 = vpop.f32.mrb[0].mxu0
        %v577 = vpop.f32.mrb[0].mxu0
        %v578 = vadd.f32 0.0, %v577
        %v579 = vpop.f32.mrb[0].mxu0
        %580 = vmatprep.mubr.bf16.mxu0 0
        %581 = vmatmul.mubr.bf16.gmra.mrb[0].mxu0 %v432
        %v582 = vpop.f32.mrb[0].mxu0
        %v583 = vadd.f32 0.0, %v582
        %v584 = vpop.f32.mrb[0].mxu0
        %v585 = vpop.f32.mrb[0].mxu0
        %v586 = vadd.f32 0.0, %v585
        %v587 = vpop.f32.mrb[0].mxu0
        %588 = vmatprep.mubr.bf16.mxu0 0
        %589 = vmatmul.mubr.bf16.gmra.mrb[0].mxu0 %v435
        %v590 = vpop.f32.mrb[0].mxu0
        %v591 = vadd.f32 0.0, %v590
        %v592 = vpop.f32.mrb[0].mxu0
        %v593 = vpop.f32.mrb[0].mxu0
        %v594 = vadd.f32 0.0, %v593
        %v595 = vpop.f32.mrb[0].mxu0
        %596 = vmatprep.mubr.bf16.mxu0 0
        %597 = vmatmul.mubr.bf16.gmra.mrb[0].mxu0 %v438
        %v598 = vpop.f32.mrb[0].mxu0
        %v599 = vadd.f32 0.0, %v598
        %v600 = vpop.f32.mrb[0].mxu0
        %v601 = vpop.f32.mrb[0].mxu0
        %v602 = vadd.f32 0.0, %v601
        %v603 = vpop.f32.mrb[0].mxu0
        %604 = vdwg.mxu0
        %v637 = vunpack.c.l.b16 %v238
        %v638 = vunpack.c.l.b16 %v239
        %v639 = vunpack.c.l.b16 %v240
        %v640 = vunpack.c.l.b16 %v241
        %v641 = vunpack.c.l.b16 %v242
        %v642 = vunpack.c.l.b16 %v243
        %v643 = vunpack.c.l.b16 %v244
        %v644 = vunpack.c.l.b16 %v245
        %v645 = vunpack.c.l.b16 %v246
        %v646 = vunpack.c.l.b16 %v247
        %v647 = vunpack.c.l.b16 %v248
        %v648 = vunpack.c.l.b16 %v249
        %v649 = vunpack.c.l.b16 %v250
        %v650 = vunpack.c.l.b16 %v251
        %v651 = vunpack.c.l.b16 %v252
        %v652 = vunpack.c.l.b16 %v253
        %v653 = vunpack.c.l.b16 %v254
        %v654 = vunpack.c.l.b16 %v255
        %v655 = vunpack.c.l.b16 %v256
        %v656 = vunpack.c.l.b16 %v257
        %v657 = vunpack.c.l.b16 %v258
        %v658 = vunpack.c.l.b16 %v259
        %v659 = vunpack.c.l.b16 %v260
        %v660 = vunpack.c.l.b16 %v261
        %v661 = vunpack.c.l.b16 %v262
        %v662 = vunpack.c.l.b16 %v263
        %v663 = vunpack.c.l.b16 %v264
        %v664 = vunpack.c.l.b16 %v265
        %v665 = vunpack.c.l.b16 %v266
        %v666 = vunpack.c.l.b16 %v267
        %v667 = vunpack.c.l.b16 %v268
        %v668 = vunpack.c.l.b16 %v269
        %v669 = vpack.c.b16 %v638, %v637
        %v670 = vpack.c.b16 %v640, %v639
        %v671 = vpack.c.b16 %v642, %v641
        %v672 = vpack.c.b16 %v644, %v643
        %v673 = vpack.c.b16 %v646, %v645
        %v674 = vpack.c.b16 %v648, %v647
        %v675 = vpack.c.b16 %v650, %v649
        %v676 = vpack.c.b16 %v652, %v651
        %v677 = vpack.c.b16 %v654, %v653
        %v678 = vpack.c.b16 %v656, %v655
        %v679 = vpack.c.b16 %v658, %v657
        %v680 = vpack.c.b16 %v660, %v659
        %v681 = vpack.c.b16 %v662, %v661
        %v682 = vpack.c.b16 %v664, %v663
        %v683 = vpack.c.b16 %v666, %v665
        %v684 = vpack.c.b16 %v668, %v667
        %v686 = vsel %vm391, %v669, 0
        %v689 = vsel %vm391, %v670, 0
        %v692 = vsel %vm391, %v671, 0
        %v695 = vsel %vm391, %v672, 0
        %v698 = vsel %vm391, %v673, 0
        %v701 = vsel %vm391, %v674, 0
        %v704 = vsel %vm391, %v675, 0
        %v707 = vsel %vm391, %v676, 0
        %v710 = vsel %vm391, %v677, 0
        %v713 = vsel %vm391, %v678, 0
        %v716 = vsel %vm391, %v679, 0
        %v719 = vsel %vm391, %v680, 0
        %v722 = vsel %vm391, %v681, 0
        %v725 = vsel %vm391, %v682, 0
        %v728 = vsel %vm391, %v683, 0
        %v731 = vsel %vm391, %v684, 0
        %v734 = vsel %vm440, %v270, 0
        %736 = vmatprep.subr.bf16.mxu0 0
        %737 = vmatpush1.bf16.msra.mxu0 %v734
        %738 = vmatprep.subr.bf16.mxu0 0
        %739 = vmatpush1.bf16.msra.mxu0 0
        %740 = vmatprep.subr.bf16.mxu0 0
        %741 = vmatpush1.bf16.msra.mxu0 0
        %742 = vmatprep.subr.bf16.mxu0 0
        %743 = vmatpush1.bf16.msra.mxu0 0
        %744 = vmatprep.subr.bf16.mxu0 0
        %745 = vmatpush1.bf16.msra.mxu0 0
        %746 = vmatprep.subr.bf16.mxu0 0
        %747 = vmatpush1.bf16.msra.mxu0 0
        %748 = vmatprep.subr.bf16.mxu0 0
        %749 = vmatpush1.bf16.msra.mxu0 0
        %750 = vmatprep.subr.bf16.mxu0 0
        %751 = vmatpush1.bf16.msra.mxu0 0
        %752 = vmatprep.subr.bf16.mxu0 0
        %753 = vmatpush1.bf16.msra.mxu0 0
        %754 = vmatprep.subr.bf16.mxu0 0
        %755 = vmatpush1.bf16.msra.mxu0 0
        %756 = vmatprep.subr.bf16.mxu0 0
        %757 = vmatpush1.bf16.msra.mxu0 0
        %758 = vmatprep.subr.bf16.mxu0 0
        %759 = vmatpush1.bf16.msra.mxu0 0
        %760 = vmatprep.subr.bf16.mxu0 0
        %761 = vmatpush1.bf16.msra.mxu0 0
        %762 = vmatprep.subr.bf16.mxu0 0
        %763 = vmatpush1.bf16.msra.mxu0 0
        %764 = vmatprep.subr.bf16.mxu0 0
        %765 = vmatpush1.bf16.msra.mxu0 0
        %766 = vmatprep.subr.bf16.mxu0 0
        %767 = vmatpush1.bf16.msra.mxu0 0
        %768 = vmatprep.mubr.bf16.mxu0 0
        %769 = vmatmul.mubr.bf16.gmra.mrb[0].mxu0 %v686
        %v770 = vpop.f32.mrb[0].mxu0
        %v771 = vadd.f32 %v479, %v770
        %v772 = vpop.f32.mrb[0].mxu0
        %v773 = vpop.f32.mrb[0].mxu0
        %v774 = vadd.f32 %v482, %v773
        %v775 = vpop.f32.mrb[0].mxu0
        %776 = vmatprep.mubr.bf16.mxu0 0
        %777 = vmatmul.mubr.bf16.gmra.mrb[0].mxu0 %v689
        %v778 = vpop.f32.mrb[0].mxu0
        %v779 = vadd.f32 %v487, %v778
        %v780 = vpop.f32.mrb[0].mxu0
        %v781 = vpop.f32.mrb[0].mxu0
        %v782 = vadd.f32 %v490, %v781
        %v783 = vpop.f32.mrb[0].mxu0
        %784 = vmatprep.mubr.bf16.mxu0 0
        %785 = vmatmul.mubr.bf16.gmra.mrb[0].mxu0 %v692
        %v786 = vpop.f32.mrb[0].mxu0
        %v787 = vadd.f32 %v495, %v786
        %v788 = vpop.f32.mrb[0].mxu0
        %v789 = vpop.f32.mrb[0].mxu0
        %v790 = vadd.f32 %v498, %v789
        %v791 = vpop.f32.mrb[0].mxu0
        %792 = vmatprep.mubr.bf16.mxu0 0
        %793 = vmatmul.mubr.bf16.gmra.mrb[0].mxu0 %v695
        %v794 = vpop.f32.mrb[0].mxu0
        %v795 = vadd.f32 %v503, %v794
        %v796 = vpop.f32.mrb[0].mxu0
        %v797 = vpop.f32.mrb[0].mxu0
        %v798 = vadd.f32 %v506, %v797
        %v799 = vpop.f32.mrb[0].mxu0
        %800 = vmatprep.mubr.bf16.mxu0 0
        %801 = vmatmul.mubr.bf16.gmra.mrb[0].mxu0 %v698
        %v802 = vpop.f32.mrb[0].mxu0
        %v803 = vadd.f32 %v511, %v802
        %v804 = vpop.f32.mrb[0].mxu0
        %v805 = vpop.f32.mrb[0].mxu0
        %v806 = vadd.f32 %v514, %v805
        %v807 = vpop.f32.mrb[0].mxu0
        %808 = vmatprep.mubr.bf16.mxu0 0
        %809 = vmatmul.mubr.bf16.gmra.mrb[0].mxu0 %v701
        %v810 = vpop.f32.mrb[0].mxu0
        %v811 = vadd.f32 %v519, %v810
        %v812 = vpop.f32.mrb[0].mxu0
        %v813 = vpop.f32.mrb[0].mxu0
        %v814 = vadd.f32 %v522, %v813
        %v815 = vpop.f32.mrb[0].mxu0
        %816 = vmatprep.mubr.bf16.mxu0 0
        %817 = vmatmul.mubr.bf16.gmra.mrb[0].mxu0 %v704
        %v818 = vpop.f32.mrb[0].mxu0
        %v819 = vadd.f32 %v527, %v818
        %v820 = vpop.f32.mrb[0].mxu0
        %v821 = vpop.f32.mrb[0].mxu0
        %v822 = vadd.f32 %v530, %v821
        %v823 = vpop.f32.mrb[0].mxu0
        %824 = vmatprep.mubr.bf16.mxu0 0
        %825 = vmatmul.mubr.bf16.gmra.mrb[0].mxu0 %v707
        %v826 = vpop.f32.mrb[0].mxu0
        %v827 = vadd.f32 %v535, %v826
        %v828 = vpop.f32.mrb[0].mxu0
        %v829 = vpop.f32.mrb[0].mxu0
        %v830 = vadd.f32 %v538, %v829
        %v831 = vpop.f32.mrb[0].mxu0
        %832 = vmatprep.mubr.bf16.mxu0 0
        %833 = vmatmul.mubr.bf16.gmra.mrb[0].mxu0 %v710
        %v834 = vpop.f32.mrb[0].mxu0
        %v835 = vadd.f32 %v543, %v834
        %v836 = vpop.f32.mrb[0].mxu0
        %v837 = vpop.f32.mrb[0].mxu0
        %v838 = vadd.f32 %v546, %v837
        %v839 = vpop.f32.mrb[0].mxu0
        %840 = vmatprep.mubr.bf16.mxu0 0
        %841 = vmatmul.mubr.bf16.gmra.mrb[0].mxu0 %v713
        %v842 = vpop.f32.mrb[0].mxu0
        %v843 = vadd.f32 %v551, %v842
        %v844 = vpop.f32.mrb[0].mxu0
        %v845 = vpop.f32.mrb[0].mxu0
        %v846 = vadd.f32 %v554, %v845
        %v847 = vpop.f32.mrb[0].mxu0
        %848 = vmatprep.mubr.bf16.mxu0 0
        %849 = vmatmul.mubr.bf16.gmra.mrb[0].mxu0 %v716
        %v850 = vpop.f32.mrb[0].mxu0
        %v851 = vadd.f32 %v559, %v850
        %v852 = vpop.f32.mrb[0].mxu0
        %v853 = vpop.f32.mrb[0].mxu0
        %v854 = vadd.f32 %v562, %v853
        %v855 = vpop.f32.mrb[0].mxu0
        %856 = vmatprep.mubr.bf16.mxu0 0
        %857 = vmatmul.mubr.bf16.gmra.mrb[0].mxu0 %v719
        %v858 = vpop.f32.mrb[0].mxu0
        %v859 = vadd.f32 %v567, %v858
        %v860 = vpop.f32.mrb[0].mxu0
        %v861 = vpop.f32.mrb[0].mxu0
        %v862 = vadd.f32 %v570, %v861
        %v863 = vpop.f32.mrb[0].mxu0
        %864 = vmatprep.mubr.bf16.mxu0 0
        %865 = vmatmul.mubr.bf16.gmra.mrb[0].mxu0 %v722
        %v866 = vpop.f32.mrb[0].mxu0
        %v867 = vadd.f32 %v575, %v866
        %v868 = vpop.f32.mrb[0].mxu0
        %v869 = vpop.f32.mrb[0].mxu0
        %v870 = vadd.f32 %v578, %v869
        %v871 = vpop.f32.mrb[0].mxu0
        %872 = vmatprep.mubr.bf16.mxu0 0
        %873 = vmatmul.mubr.bf16.gmra.mrb[0].mxu0 %v725
        %v874 = vpop.f32.mrb[0].mxu0
        %v875 = vadd.f32 %v583, %v874
        %v876 = vpop.f32.mrb[0].mxu0
        %v877 = vpop.f32.mrb[0].mxu0
        %v878 = vadd.f32 %v586, %v877
        %v879 = vpop.f32.mrb[0].mxu0
        %880 = vmatprep.mubr.bf16.mxu0 0
        %881 = vmatmul.mubr.bf16.gmra.mrb[0].mxu0 %v728
        %v882 = vpop.f32.mrb[0].mxu0
        %v883 = vadd.f32 %v591, %v882
        %v884 = vpop.f32.mrb[0].mxu0
        %v885 = vpop.f32.mrb[0].mxu0
        %v886 = vadd.f32 %v594, %v885
        %v887 = vpop.f32.mrb[0].mxu0
        %888 = vmatprep.mubr.bf16.mxu0 0
        %889 = vmatmul.mubr.bf16.gmra.mrb[0].mxu0 %v731
        %v890 = vpop.f32.mrb[0].mxu0
        %v891 = vadd.f32 %v599, %v890
        %v892 = vpop.f32.mrb[0].mxu0
        %v893 = vpop.f32.mrb[0].mxu0
        %v894 = vadd.f32 %v602, %v893
        %v895 = vpop.f32.mrb[0].mxu0
        %896 = vdwg.mxu0
        %s897 = sadd.s32 %s232, 2
        %s898 = smul.u32 %s897, 16
        %s899 = sshra.s32 %s898, 3
        %s900 = sand.u32 %s898, 7
        %s901 = smul.addr %s899, 4
        %s902 = scalar_lea.vmem %s199, %s901 [#allocation2]
        %v903 = vld [vmem:[%s902] sm:$0xf]
        %v904 = vld [vmem:[%s902 + $0x4] sm:$0xf]
        %v905 = vld [vmem:[%s902 + $0x8] sm:$0xf]
        %v906 = vld [vmem:[%s902 + $0xc] sm:$0xf]
        %v907 = vld [vmem:[%s902 + $0x10] sm:$0xf]
        %v908 = vld [vmem:[%s902 + $0x14] sm:$0xf]
        %v909 = vld [vmem:[%s902 + $0x18] sm:$0xf]
        %v910 = vld [vmem:[%s902 + $0x1c] sm:$0xf]
        %v911 = vld [vmem:[%s902 + $0x20] sm:$0xf]
        %v912 = vld [vmem:[%s902 + $0x24] sm:$0xf]
        %v913 = vld [vmem:[%s902 + $0x28] sm:$0xf]
        %v914 = vld [vmem:[%s902 + $0x2c] sm:$0xf]
        %v915 = vld [vmem:[%s902 + $0x30] sm:$0xf]
        %v916 = vld [vmem:[%s902 + $0x34] sm:$0xf]
        %v917 = vld [vmem:[%s902 + $0x38] sm:$0xf]
        %v918 = vld [vmem:[%s902 + $0x3c] sm:$0xf]
        %v919 = vld [vmem:[%s902 + $0x40] sm:$0xf]
        %v920 = vld [vmem:[%s902 + $0x44] sm:$0xf]
        %v921 = vld [vmem:[%s902 + $0x48] sm:$0xf]
        %v922 = vld [vmem:[%s902 + $0x4c] sm:$0xf]
        %v923 = vld [vmem:[%s902 + $0x50] sm:$0xf]
        %v924 = vld [vmem:[%s902 + $0x54] sm:$0xf]
        %v925 = vld [vmem:[%s902 + $0x58] sm:$0xf]
        %v926 = vld [vmem:[%s902 + $0x5c] sm:$0xf]
        %v927 = vld [vmem:[%s902 + $0x60] sm:$0xf]
        %v928 = vld [vmem:[%s902 + $0x64] sm:$0xf]
        %v929 = vld [vmem:[%s902 + $0x68] sm:$0xf]
        %v930 = vld [vmem:[%s902 + $0x6c] sm:$0xf]
        %v931 = vld [vmem:[%s902 + $0x70] sm:$0xf]
        %v932 = vld [vmem:[%s902 + $0x74] sm:$0xf]
        %v933 = vld [vmem:[%s902 + $0x78] sm:$0xf]
        %v934 = vld [vmem:[%s902 + $0x7c] sm:$0xf]
        %s935 = scalar_lea.vmem [#allocation5], 4
        %v936 = vld [vmem:[%s935] sm:$0x3]
        %v969 = vunpack.c.l.b16 %v903
        %v970 = vunpack.c.l.b16 %v904
        %v971 = vunpack.c.l.b16 %v905
        %v972 = vunpack.c.l.b16 %v906
        %v973 = vunpack.c.l.b16 %v907
        %v974 = vunpack.c.l.b16 %v908
        %v975 = vunpack.c.l.b16 %v909
        %v976 = vunpack.c.l.b16 %v910
        %v977 = vunpack.c.l.b16 %v911
        %v978 = vunpack.c.l.b16 %v912
        %v979 = vunpack.c.l.b16 %v913
        %v980 = vunpack.c.l.b16 %v914
        %v981 = vunpack.c.l.b16 %v915
        %v982 = vunpack.c.l.b16 %v916
        %v983 = vunpack.c.l.b16 %v917
        %v984 = vunpack.c.l.b16 %v918
        %v985 = vunpack.c.l.b16 %v919
        %v986 = vunpack.c.l.b16 %v920
        %v987 = vunpack.c.l.b16 %v921
        %v988 = vunpack.c.l.b16 %v922
        %v989 = vunpack.c.l.b16 %v923
        %v990 = vunpack.c.l.b16 %v924
        %v991 = vunpack.c.l.b16 %v925
        %v992 = vunpack.c.l.b16 %v926
        %v993 = vunpack.c.l.b16 %v927
        %v994 = vunpack.c.l.b16 %v928
        %v995 = vunpack.c.l.b16 %v929
        %v996 = vunpack.c.l.b16 %v930
        %v997 = vunpack.c.l.b16 %v931
        %v998 = vunpack.c.l.b16 %v932
        %v999 = vunpack.c.l.b16 %v933
        %v1000 = vunpack.c.l.b16 %v934
        %v1001 = vpack.c.b16 %v970, %v969
        %v1002 = vpack.c.b16 %v972, %v971
        %v1003 = vpack.c.b16 %v974, %v973
        %v1004 = vpack.c.b16 %v976, %v975
        %v1005 = vpack.c.b16 %v978, %v977
        %v1006 = vpack.c.b16 %v980, %v979
        %v1007 = vpack.c.b16 %v982, %v981
        %v1008 = vpack.c.b16 %v984, %v983
        %v1009 = vpack.c.b16 %v986, %v985
        %v1010 = vpack.c.b16 %v988, %v987
        %v1011 = vpack.c.b16 %v990, %v989
        %v1012 = vpack.c.b16 %v992, %v991
        %v1013 = vpack.c.b16 %v994, %v993
        %v1014 = vpack.c.b16 %v996, %v995
        %v1015 = vpack.c.b16 %v998, %v997
        %v1016 = vpack.c.b16 %v1000, %v999
        %v1018 = vsel %vm391, %v1001, 0
        %v1021 = vsel %vm391, %v1002, 0
        %v1024 = vsel %vm391, %v1003, 0
        %v1027 = vsel %vm391, %v1004, 0
        %v1030 = vsel %vm391, %v1005, 0
        %v1033 = vsel %vm391, %v1006, 0
        %v1036 = vsel %vm391, %v1007, 0
        %v1039 = vsel %vm391, %v1008, 0
        %v1042 = vsel %vm391, %v1009, 0
        %v1045 = vsel %vm391, %v1010, 0
        %v1048 = vsel %vm391, %v1011, 0
        %v1051 = vsel %vm391, %v1012, 0
        %v1054 = vsel %vm391, %v1013, 0
        %v1057 = vsel %vm391, %v1014, 0
        %v1060 = vsel %vm391, %v1015, 0
        %v1063 = vsel %vm391, %v1016, 0
        %v1066 = vsel %vm440, %v936, 0
        %1068 = vmatprep.subr.bf16.mxu0 0
        %1069 = vmatpush1.bf16.msra.mxu0 %v1066
        %1070 = vmatprep.subr.bf16.mxu0 0
        %1071 = vmatpush1.bf16.msra.mxu0 0
        %1072 = vmatprep.subr.bf16.mxu0 0
        %1073 = vmatpush1.bf16.msra.mxu0 0
        %1074 = vmatprep.subr.bf16.mxu0 0
        %1075 = vmatpush1.bf16.msra.mxu0 0
        %1076 = vmatprep.subr.bf16.mxu0 0
        %1077 = vmatpush1.bf16.msra.mxu0 0
        %1078 = vmatprep.subr.bf16.mxu0 0
        %1079 = vmatpush1.bf16.msra.mxu0 0
        %1080 = vmatprep.subr.bf16.mxu0 0
        %1081 = vmatpush1.bf16.msra.mxu0 0
        %1082 = vmatprep.subr.bf16.mxu0 0
        %1083 = vmatpush1.bf16.msra.mxu0 0
        %1084 = vmatprep.subr.bf16.mxu0 0
        %1085 = vmatpush1.bf16.msra.mxu0 0
        %1086 = vmatprep.subr.bf16.mxu0 0
        %1087 = vmatpush1.bf16.msra.mxu0 0
        %1088 = vmatprep.subr.bf16.mxu0 0
        %1089 = vmatpush1.bf16.msra.mxu0 0
        %1090 = vmatprep.subr.bf16.mxu0 0
        %1091 = vmatpush1.bf16.msra.mxu0 0
        %1092 = vmatprep.subr.bf16.mxu0 0
        %1093 = vmatpush1.bf16.msra.mxu0 0
        %1094 = vmatprep.subr.bf16.mxu0 0
        %1095 = vmatpush1.bf16.msra.mxu0 0
        %1096 = vmatprep.subr.bf16.mxu0 0
        %1097 = vmatpush1.bf16.msra.mxu0 0
        %1098 = vmatprep.subr.bf16.mxu0 0
        %1099 = vmatpush1.bf16.msra.mxu0 0
        %1100 = vmatprep.mubr.bf16.mxu0 0
        %1101 = vmatmul.mubr.bf16.gmra.mrb[0].mxu0 %v1018
        %v1102 = vpop.f32.mrb[0].mxu0
        %v1103 = vadd.f32 0.0, %v1102
        %v1104 = vpop.f32.mrb[0].mxu0
        %v1105 = vpop.f32.mrb[0].mxu0
        %v1106 = vadd.f32 0.0, %v1105
        %v1107 = vpop.f32.mrb[0].mxu0
        %1108 = vmatprep.mubr.bf16.mxu0 0
        %1109 = vmatmul.mubr.bf16.gmra.mrb[0].mxu0 %v1021
        %v1110 = vpop.f32.mrb[0].mxu0
        %v1111 = vadd.f32 0.0, %v1110
        %v1112 = vpop.f32.mrb[0].mxu0
        %v1113 = vpop.f32.mrb[0].mxu0
        %v1114 = vadd.f32 0.0, %v1113
        %v1115 = vpop.f32.mrb[0].mxu0
        %1116 = vmatprep.mubr.bf16.mxu0 0
        %1117 = vmatmul.mubr.bf16.gmra.mrb[0].mxu0 %v1024
        %v1118 = vpop.f32.mrb[0].mxu0
        %v1119 = vadd.f32 0.0, %v1118
        %v1120 = vpop.f32.mrb[0].mxu0
        %v1121 = vpop.f32.mrb[0].mxu0
        %v1122 = vadd.f32 0.0, %v1121
        %v1123 = vpop.f32.mrb[0].mxu0
        %1124 = vmatprep.mubr.bf16.mxu0 0
        %1125 = vmatmul.mubr.bf16.gmra.mrb[0].mxu0 %v1027
        %v1126 = vpop.f32.mrb[0].mxu0
        %v1127 = vadd.f32 0.0, %v1126
        %v1128 = vpop.f32.mrb[0].mxu0
        %v1129 = vpop.f32.mrb[0].mxu0
        %v1130 = vadd.f32 0.0, %v1129
        %v1131 = vpop.f32.mrb[0].mxu0
        %1132 = vmatprep.mubr.bf16.mxu0 0
        %1133 = vmatmul.mubr.bf16.gmra.mrb[0].mxu0 %v1030
        %v1134 = vpop.f32.mrb[0].mxu0
        %v1135 = vadd.f32 0.0, %v1134
        %v1136 = vpop.f32.mrb[0].mxu0
        %v1137 = vpop.f32.mrb[0].mxu0
        %v1138 = vadd.f32 0.0, %v1137
        %v1139 = vpop.f32.mrb[0].mxu0
        %1140 = vmatprep.mubr.bf16.mxu0 0
        %1141 = vmatmul.mubr.bf16.gmra.mrb[0].mxu0 %v1033
        %v1142 = vpop.f32.mrb[0].mxu0
        %v1143 = vadd.f32 0.0, %v1142
        %v1144 = vpop.f32.mrb[0].mxu0
        %v1145 = vpop.f32.mrb[0].mxu0
        %v1146 = vadd.f32 0.0, %v1145
        %v1147 = vpop.f32.mrb[0].mxu0
        %1148 = vmatprep.mubr.bf16.mxu0 0
        %1149 = vmatmul.mubr.bf16.gmra.mrb[0].mxu0 %v1036
        %v1150 = vpop.f32.mrb[0].mxu0
        %v1151 = vadd.f32 0.0, %v1150
        %v1152 = vpop.f32.mrb[0].mxu0
        %v1153 = vpop.f32.mrb[0].mxu0
        %v1154 = vadd.f32 0.0, %v1153
        %v1155 = vpop.f32.mrb[0].mxu0
        %1156 = vmatprep.mubr.bf16.mxu0 0
        %1157 = vmatmul.mubr.bf16.gmra.mrb[0].mxu0 %v1039
        %v1158 = vpop.f32.mrb[0].mxu0
        %v1159 = vadd.f32 0.0, %v1158
        %v1160 = vpop.f32.mrb[0].mxu0
        %v1161 = vpop.f32.mrb[0].mxu0
        %v1162 = vadd.f32 0.0, %v1161
        %v1163 = vpop.f32.mrb[0].mxu0
        %1164 = vmatprep.mubr.bf16.mxu0 0
        %1165 = vmatmul.mubr.bf16.gmra.mrb[0].mxu0 %v1042
        %v1166 = vpop.f32.mrb[0].mxu0
        %v1167 = vadd.f32 0.0, %v1166
        %v1168 = vpop.f32.mrb[0].mxu0
        %v1169 = vpop.f32.mrb[0].mxu0
        %v1170 = vadd.f32 0.0, %v1169
        %v1171 = vpop.f32.mrb[0].mxu0
        %1172 = vmatprep.mubr.bf16.mxu0 0
        %1173 = vmatmul.mubr.bf16.gmra.mrb[0].mxu0 %v1045
        %v1174 = vpop.f32.mrb[0].mxu0
        %v1175 = vadd.f32 0.0, %v1174
        %v1176 = vpop.f32.mrb[0].mxu0
        %v1177 = vpop.f32.mrb[0].mxu0
        %v1178 = vadd.f32 0.0, %v1177
        %v1179 = vpop.f32.mrb[0].mxu0
        %1180 = vmatprep.mubr.bf16.mxu0 0
        %1181 = vmatmul.mubr.bf16.gmra.mrb[0].mxu0 %v1048
        %v1182 = vpop.f32.mrb[0].mxu0
        %v1183 = vadd.f32 0.0, %v1182
        %v1184 = vpop.f32.mrb[0].mxu0
        %v1185 = vpop.f32.mrb[0].mxu0
        %v1186 = vadd.f32 0.0, %v1185
        %v1187 = vpop.f32.mrb[0].mxu0
        %1188 = vmatprep.mubr.bf16.mxu0 0
        %1189 = vmatmul.mubr.bf16.gmra.mrb[0].mxu0 %v1051
        %v1190 = vpop.f32.mrb[0].mxu0
        %v1191 = vadd.f32 0.0, %v1190
        %v1192 = vpop.f32.mrb[0].mxu0
        %v1193 = vpop.f32.mrb[0].mxu0
        %v1194 = vadd.f32 0.0, %v1193
        %v1195 = vpop.f32.mrb[0].mxu0
        %1196 = vmatprep.mubr.bf16.mxu0 0
        %1197 = vmatmul.mubr.bf16.gmra.mrb[0].mxu0 %v1054
        %v1198 = vpop.f32.mrb[0].mxu0
        %v1199 = vadd.f32 0.0, %v1198
        %v1200 = vpop.f32.mrb[0].mxu0
        %v1201 = vpop.f32.mrb[0].mxu0
        %v1202 = vadd.f32 0.0, %v1201
        %v1203 = vpop.f32.mrb[0].mxu0
        %1204 = vmatprep.mubr.bf16.mxu0 0
        %1205 = vmatmul.mubr.bf16.gmra.mrb[0].mxu0 %v1057
        %v1206 = vpop.f32.mrb[0].mxu0
        %v1207 = vadd.f32 0.0, %v1206
        %v1208 = vpop.f32.mrb[0].mxu0
        %v1209 = vpop.f32.mrb[0].mxu0
        %v1210 = vadd.f32 0.0, %v1209
        %v1211 = vpop.f32.mrb[0].mxu0
        %1212 = vmatprep.mubr.bf16.mxu0 0
        %1213 = vmatmul.mubr.bf16.gmra.mrb[0].mxu0 %v1060
        %v1214 = vpop.f32.mrb[0].mxu0
        %v1215 = vadd.f32 0.0, %v1214
        %v1216 = vpop.f32.mrb[0].mxu0
        %v1217 = vpop.f32.mrb[0].mxu0
        %v1218 = vadd.f32 0.0, %v1217
        %v1219 = vpop.f32.mrb[0].mxu0
        %1220 = vmatprep.mubr.bf16.mxu0 0
        %1221 = vmatmul.mubr.bf16.gmra.mrb[0].mxu0 %v1063
        %v1222 = vpop.f32.mrb[0].mxu0
        %v1223 = vadd.f32 0.0, %v1222
        %v1224 = vpop.f32.mrb[0].mxu0
        %v1225 = vpop.f32.mrb[0].mxu0
        %v1226 = vadd.f32 0.0, %v1225
        %v1227 = vpop.f32.mrb[0].mxu0
        %1228 = vdwg.mxu0
        %v1229 = vadd.f32 %v771, %v1103
        %v1230 = vadd.f32 %v774, %v1106
        %v1231 = vadd.f32 %v779, %v1111
        %v1232 = vadd.f32 %v782, %v1114
        %v1233 = vadd.f32 %v787, %v1119
        %v1234 = vadd.f32 %v790, %v1122
        %v1235 = vadd.f32 %v795, %v1127
        %v1236 = vadd.f32 %v798, %v1130
        %v1237 = vadd.f32 %v803, %v1135
        %v1238 = vadd.f32 %v806, %v1138
        %v1239 = vadd.f32 %v811, %v1143
        %v1240 = vadd.f32 %v814, %v1146
        %v1241 = vadd.f32 %v819, %v1151
        %v1242 = vadd.f32 %v822, %v1154
        %v1243 = vadd.f32 %v827, %v1159
        %v1244 = vadd.f32 %v830, %v1162
        %v1245 = vadd.f32 %v835, %v1167
        %v1246 = vadd.f32 %v838, %v1170
        %v1247 = vadd.f32 %v843, %v1175
        %v1248 = vadd.f32 %v846, %v1178
        %v1249 = vadd.f32 %v851, %v1183
        %v1250 = vadd.f32 %v854, %v1186
        %v1251 = vadd.f32 %v859, %v1191
        %v1252 = vadd.f32 %v862, %v1194
        %v1253 = vadd.f32 %v867, %v1199
        %v1254 = vadd.f32 %v870, %v1202
        %v1255 = vadd.f32 %v875, %v1207
        %v1256 = vadd.f32 %v878, %v1210
        %v1257 = vadd.f32 %v883, %v1215
        %v1258 = vadd.f32 %v886, %v1218
        %v1259 = vadd.f32 %v891, %v1223
        %v1260 = vadd.f32 %v894, %v1226
        %s1261 = sadd.s32 %s232, 3
        %s1262 = smul.u32 %s1261, 16
        %s1263 = sshra.s32 %s1262, 3
        %s1264 = sand.u32 %s1262, 7
        %s1265 = smul.addr %s1263, 4
        %s1266 = scalar_lea.vmem %s199, %s1265 [#allocation2]
        %v1267 = vld [vmem:[%s1266] sm:$0xf]
        %v1268 = vld [vmem:[%s1266 + $0x4] sm:$0xf]
        %v1269 = vld [vmem:[%s1266 + $0x8] sm:$0xf]
        %v1270 = vld [vmem:[%s1266 + $0xc] sm:$0xf]
        %v1271 = vld [vmem:[%s1266 + $0x10] sm:$0xf]
        %v1272 = vld [vmem:[%s1266 + $0x14] sm:$0xf]
        %v1273 = vld [vmem:[%s1266 + $0x18] sm:$0xf]
        %v1274 = vld [vmem:[%s1266 + $0x1c] sm:$0xf]
        %v1275 = vld [vmem:[%s1266 + $0x20] sm:$0xf]
        %v1276 = vld [vmem:[%s1266 + $0x24] sm:$0xf]
        %v1277 = vld [vmem:[%s1266 + $0x28] sm:$0xf]
        %v1278 = vld [vmem:[%s1266 + $0x2c] sm:$0xf]
        %v1279 = vld [vmem:[%s1266 + $0x30] sm:$0xf]
        %v1280 = vld [vmem:[%s1266 + $0x34] sm:$0xf]
        %v1281 = vld [vmem:[%s1266 + $0x38] sm:$0xf]
        %v1282 = vld [vmem:[%s1266 + $0x3c] sm:$0xf]
        %v1283 = vld [vmem:[%s1266 + $0x40] sm:$0xf]
        %v1284 = vld [vmem:[%s1266 + $0x44] sm:$0xf]
        %v1285 = vld [vmem:[%s1266 + $0x48] sm:$0xf]
        %v1286 = vld [vmem:[%s1266 + $0x4c] sm:$0xf]
        %v1287 = vld [vmem:[%s1266 + $0x50] sm:$0xf]
        %v1288 = vld [vmem:[%s1266 + $0x54] sm:$0xf]
        %v1289 = vld [vmem:[%s1266 + $0x58] sm:$0xf]
        %v1290 = vld [vmem:[%s1266 + $0x5c] sm:$0xf]
        %v1291 = vld [vmem:[%s1266 + $0x60] sm:$0xf]
        %v1292 = vld [vmem:[%s1266 + $0x64] sm:$0xf]
        %v1293 = vld [vmem:[%s1266 + $0x68] sm:$0xf]
        %v1294 = vld [vmem:[%s1266 + $0x6c] sm:$0xf]
        %v1295 = vld [vmem:[%s1266 + $0x70] sm:$0xf]
        %v1296 = vld [vmem:[%s1266 + $0x74] sm:$0xf]
        %v1297 = vld [vmem:[%s1266 + $0x78] sm:$0xf]
        %v1298 = vld [vmem:[%s1266 + $0x7c] sm:$0xf]
        %s1299 = scalar_lea.vmem [#allocation5], 6
        %v1300 = vld [vmem:[%s1299] sm:$0x3]
        %v1333 = vunpack.c.l.b16 %v1267
        %v1334 = vunpack.c.l.b16 %v1268
        %v1335 = vunpack.c.l.b16 %v1269
        %v1336 = vunpack.c.l.b16 %v1270
        %v1337 = vunpack.c.l.b16 %v1271
        %v1338 = vunpack.c.l.b16 %v1272
        %v1339 = vunpack.c.l.b16 %v1273
        %v1340 = vunpack.c.l.b16 %v1274
        %v1341 = vunpack.c.l.b16 %v1275
        %v1342 = vunpack.c.l.b16 %v1276
        %v1343 = vunpack.c.l.b16 %v1277
        %v1344 = vunpack.c.l.b16 %v1278
        %v1345 = vunpack.c.l.b16 %v1279
        %v1346 = vunpack.c.l.b16 %v1280
        %v1347 = vunpack.c.l.b16 %v1281
        %v1348 = vunpack.c.l.b16 %v1282
        %v1349 = vunpack.c.l.b16 %v1283
        %v1350 = vunpack.c.l.b16 %v1284
        %v1351 = vunpack.c.l.b16 %v1285
        %v1352 = vunpack.c.l.b16 %v1286
        %v1353 = vunpack.c.l.b16 %v1287
        %v1354 = vunpack.c.l.b16 %v1288
        %v1355 = vunpack.c.l.b16 %v1289
        %v1356 = vunpack.c.l.b16 %v1290
        %v1357 = vunpack.c.l.b16 %v1291
        %v1358 = vunpack.c.l.b16 %v1292
        %v1359 = vunpack.c.l.b16 %v1293
        %v1360 = vunpack.c.l.b16 %v1294
        %v1361 = vunpack.c.l.b16 %v1295
        %v1362 = vunpack.c.l.b16 %v1296
        %v1363 = vunpack.c.l.b16 %v1297
        %v1364 = vunpack.c.l.b16 %v1298
        %v1365 = vpack.c.b16 %v1334, %v1333
        %v1366 = vpack.c.b16 %v1336, %v1335
        %v1367 = vpack.c.b16 %v1338, %v1337
        %v1368 = vpack.c.b16 %v1340, %v1339
        %v1369 = vpack.c.b16 %v1342, %v1341
        %v1370 = vpack.c.b16 %v1344, %v1343
        %v1371 = vpack.c.b16 %v1346, %v1345
        %v1372 = vpack.c.b16 %v1348, %v1347
        %v1373 = vpack.c.b16 %v1350, %v1349
        %v1374 = vpack.c.b16 %v1352, %v1351
        %v1375 = vpack.c.b16 %v1354, %v1353
        %v1376 = vpack.c.b16 %v1356, %v1355
        %v1377 = vpack.c.b16 %v1358, %v1357
        %v1378 = vpack.c.b16 %v1360, %v1359
        %v1379 = vpack.c.b16 %v1362, %v1361
        %v1380 = vpack.c.b16 %v1364, %v1363
        %v1382 = vsel %vm391, %v1365, 0
        %v1385 = vsel %vm391, %v1366, 0
        %v1388 = vsel %vm391, %v1367, 0
        %v1391 = vsel %vm391, %v1368, 0
        %v1394 = vsel %vm391, %v1369, 0
        %v1397 = vsel %vm391, %v1370, 0
        %v1400 = vsel %vm391, %v1371, 0
        %v1403 = vsel %vm391, %v1372, 0
        %v1406 = vsel %vm391, %v1373, 0
        %v1409 = vsel %vm391, %v1374, 0
        %v1412 = vsel %vm391, %v1375, 0
        %v1415 = vsel %vm391, %v1376, 0
        %v1418 = vsel %vm391, %v1377, 0
        %v1421 = vsel %vm391, %v1378, 0
        %v1424 = vsel %vm391, %v1379, 0
        %v1427 = vsel %vm391, %v1380, 0
        %v1430 = vsel %vm440, %v1300, 0
        %1432 = vmatprep.subr.bf16.mxu0 0
        %1433 = vmatpush1.bf16.msra.mxu0 %v1430
        %1434 = vmatprep.subr.bf16.mxu0 0
        %1435 = vmatpush1.bf16.msra.mxu0 0
        %1436 = vmatprep.subr.bf16.mxu0 0
        %1437 = vmatpush1.bf16.msra.mxu0 0
        %1438 = vmatprep.subr.bf16.mxu0 0
        %1439 = vmatpush1.bf16.msra.mxu0 0
        %1440 = vmatprep.subr.bf16.mxu0 0
        %1441 = vmatpush1.bf16.msra.mxu0 0
        %1442 = vmatprep.subr.bf16.mxu0 0
        %1443 = vmatpush1.bf16.msra.mxu0 0
        %1444 = vmatprep.subr.bf16.mxu0 0
        %1445 = vmatpush1.bf16.msra.mxu0 0
        %1446 = vmatprep.subr.bf16.mxu0 0
        %1447 = vmatpush1.bf16.msra.mxu0 0
        %1448 = vmatprep.subr.bf16.mxu0 0
        %1449 = vmatpush1.bf16.msra.mxu0 0
        %1450 = vmatprep.subr.bf16.mxu0 0
        %1451 = vmatpush1.bf16.msra.mxu0 0
        %1452 = vmatprep.subr.bf16.mxu0 0
        %1453 = vmatpush1.bf16.msra.mxu0 0
        %1454 = vmatprep.subr.bf16.mxu0 0
        %1455 = vmatpush1.bf16.msra.mxu0 0
        %1456 = vmatprep.subr.bf16.mxu0 0
        %1457 = vmatpush1.bf16.msra.mxu0 0
        %1458 = vmatprep.subr.bf16.mxu0 0
        %1459 = vmatpush1.bf16.msra.mxu0 0
        %1460 = vmatprep.subr.bf16.mxu0 0
        %1461 = vmatpush1.bf16.msra.mxu0 0
        %1462 = vmatprep.subr.bf16.mxu0 0
        %1463 = vmatpush1.bf16.msra.mxu0 0
        %1464 = vmatprep.mubr.bf16.mxu0 0
        %1465 = vmatmul.mubr.bf16.gmra.mrb[0].mxu0 %v1382
        %v1466 = vpop.f32.mrb[0].mxu0
        %v1467 = vadd.f32 0.0, %v1466
        %v1468 = vpop.f32.mrb[0].mxu0
        %v1469 = vpop.f32.mrb[0].mxu0
        %v1470 = vadd.f32 0.0, %v1469
        %v1471 = vpop.f32.mrb[0].mxu0
        %1472 = vmatprep.mubr.bf16.mxu0 0
        %1473 = vmatmul.mubr.bf16.gmra.mrb[0].mxu0 %v1385
        %v1474 = vpop.f32.mrb[0].mxu0
        %v1475 = vadd.f32 0.0, %v1474
        %v1476 = vpop.f32.mrb[0].mxu0
        %v1477 = vpop.f32.mrb[0].mxu0
        %v1478 = vadd.f32 0.0, %v1477
        %v1479 = vpop.f32.mrb[0].mxu0
        %1480 = vmatprep.mubr.bf16.mxu0 0
        %1481 = vmatmul.mubr.bf16.gmra.mrb[0].mxu0 %v1388
        %v1482 = vpop.f32.mrb[0].mxu0
        %v1483 = vadd.f32 0.0, %v1482
        %v1484 = vpop.f32.mrb[0].mxu0
        %v1485 = vpop.f32.mrb[0].mxu0
        %v1486 = vadd.f32 0.0, %v1485
        %v1487 = vpop.f32.mrb[0].mxu0
        %1488 = vmatprep.mubr.bf16.mxu0 0
        %1489 = vmatmul.mubr.bf16.gmra.mrb[0].mxu0 %v1391
        %v1490 = vpop.f32.mrb[0].mxu0
        %v1491 = vadd.f32 0.0, %v1490
        %v1492 = vpop.f32.mrb[0].mxu0
        %v1493 = vpop.f32.mrb[0].mxu0
        %v1494 = vadd.f32 0.0, %v1493
        %v1495 = vpop.f32.mrb[0].mxu0
        %1496 = vmatprep.mubr.bf16.mxu0 0
        %1497 = vmatmul.mubr.bf16.gmra.mrb[0].mxu0 %v1394
        %v1498 = vpop.f32.mrb[0].mxu0
        %v1499 = vadd.f32 0.0, %v1498
        %v1500 = vpop.f32.mrb[0].mxu0
        %v1501 = vpop.f32.mrb[0].mxu0
        %v1502 = vadd.f32 0.0, %v1501
        %v1503 = vpop.f32.mrb[0].mxu0
        %1504 = vmatprep.mubr.bf16.mxu0 0
        %1505 = vmatmul.mubr.bf16.gmra.mrb[0].mxu0 %v1397
        %v1506 = vpop.f32.mrb[0].mxu0
        %v1507 = vadd.f32 0.0, %v1506
        %v1508 = vpop.f32.mrb[0].mxu0
        %v1509 = vpop.f32.mrb[0].mxu0
        %v1510 = vadd.f32 0.0, %v1509
        %v1511 = vpop.f32.mrb[0].mxu0
        %1512 = vmatprep.mubr.bf16.mxu0 0
        %1513 = vmatmul.mubr.bf16.gmra.mrb[0].mxu0 %v1400
        %v1514 = vpop.f32.mrb[0].mxu0
        %v1515 = vadd.f32 0.0, %v1514
        %v1516 = vpop.f32.mrb[0].mxu0
        %v1517 = vpop.f32.mrb[0].mxu0
        %v1518 = vadd.f32 0.0, %v1517
        %v1519 = vpop.f32.mrb[0].mxu0
        %1520 = vmatprep.mubr.bf16.mxu0 0
        %1521 = vmatmul.mubr.bf16.gmra.mrb[0].mxu0 %v1403
        %v1522 = vpop.f32.mrb[0].mxu0
        %v1523 = vadd.f32 0.0, %v1522
        %v1524 = vpop.f32.mrb[0].mxu0
        %v1525 = vpop.f32.mrb[0].mxu0
        %v1526 = vadd.f32 0.0, %v1525
        %v1527 = vpop.f32.mrb[0].mxu0
        %1528 = vmatprep.mubr.bf16.mxu0 0
        %1529 = vmatmul.mubr.bf16.gmra.mrb[0].mxu0 %v1406
        %v1530 = vpop.f32.mrb[0].mxu0
        %v1531 = vadd.f32 0.0, %v1530
        %v1532 = vpop.f32.mrb[0].mxu0
        %v1533 = vpop.f32.mrb[0].mxu0
        %v1534 = vadd.f32 0.0, %v1533
        %v1535 = vpop.f32.mrb[0].mxu0
        %1536 = vmatprep.mubr.bf16.mxu0 0
        %1537 = vmatmul.mubr.bf16.gmra.mrb[0].mxu0 %v1409
        %v1538 = vpop.f32.mrb[0].mxu0
        %v1539 = vadd.f32 0.0, %v1538
        %v1540 = vpop.f32.mrb[0].mxu0
        %v1541 = vpop.f32.mrb[0].mxu0
        %v1542 = vadd.f32 0.0, %v1541
        %v1543 = vpop.f32.mrb[0].mxu0
        %1544 = vmatprep.mubr.bf16.mxu0 0
        %1545 = vmatmul.mubr.bf16.gmra.mrb[0].mxu0 %v1412
        %v1546 = vpop.f32.mrb[0].mxu0
        %v1547 = vadd.f32 0.0, %v1546
        %v1548 = vpop.f32.mrb[0].mxu0
        %v1549 = vpop.f32.mrb[0].mxu0
        %v1550 = vadd.f32 0.0, %v1549
        %v1551 = vpop.f32.mrb[0].mxu0
        %1552 = vmatprep.mubr.bf16.mxu0 0
        %1553 = vmatmul.mubr.bf16.gmra.mrb[0].mxu0 %v1415
        %v1554 = vpop.f32.mrb[0].mxu0
        %v1555 = vadd.f32 0.0, %v1554
        %v1556 = vpop.f32.mrb[0].mxu0
        %v1557 = vpop.f32.mrb[0].mxu0
        %v1558 = vadd.f32 0.0, %v1557
        %v1559 = vpop.f32.mrb[0].mxu0
        %1560 = vmatprep.mubr.bf16.mxu0 0
        %1561 = vmatmul.mubr.bf16.gmra.mrb[0].mxu0 %v1418
        %v1562 = vpop.f32.mrb[0].mxu0
        %v1563 = vadd.f32 0.0, %v1562
        %v1564 = vpop.f32.mrb[0].mxu0
        %v1565 = vpop.f32.mrb[0].mxu0
        %v1566 = vadd.f32 0.0, %v1565
        %v1567 = vpop.f32.mrb[0].mxu0
        %1568 = vmatprep.mubr.bf16.mxu0 0
        %1569 = vmatmul.mubr.bf16.gmra.mrb[0].mxu0 %v1421
        %v1570 = vpop.f32.mrb[0].mxu0
        %v1571 = vadd.f32 0.0, %v1570
        %v1572 = vpop.f32.mrb[0].mxu0
        %v1573 = vpop.f32.mrb[0].mxu0
        %v1574 = vadd.f32 0.0, %v1573
        %v1575 = vpop.f32.mrb[0].mxu0
        %1576 = vmatprep.mubr.bf16.mxu0 0
        %1577 = vmatmul.mubr.bf16.gmra.mrb[0].mxu0 %v1424
        %v1578 = vpop.f32.mrb[0].mxu0
        %v1579 = vadd.f32 0.0, %v1578
        %v1580 = vpop.f32.mrb[0].mxu0
        %v1581 = vpop.f32.mrb[0].mxu0
        %v1582 = vadd.f32 0.0, %v1581
        %v1583 = vpop.f32.mrb[0].mxu0
        %1584 = vmatprep.mubr.bf16.mxu0 0
        %1585 = vmatmul.mubr.bf16.gmra.mrb[0].mxu0 %v1427
        %v1586 = vpop.f32.mrb[0].mxu0
        %v1587 = vadd.f32 0.0, %v1586
        %v1588 = vpop.f32.mrb[0].mxu0
        %v1589 = vpop.f32.mrb[0].mxu0
        %v1590 = vadd.f32 0.0, %v1589
        %v1591 = vpop.f32.mrb[0].mxu0
        %1592 = vdwg.mxu0
        %v1593 = vadd.f32 %v1229, %v1467
        %v1594 = vadd.f32 %v1230, %v1470
        %v1595 = vadd.f32 %v1231, %v1475
        %v1596 = vadd.f32 %v1232, %v1478
        %v1597 = vadd.f32 %v1233, %v1483
        %v1598 = vadd.f32 %v1234, %v1486
        %v1599 = vadd.f32 %v1235, %v1491
        %v1600 = vadd.f32 %v1236, %v1494
        %v1601 = vadd.f32 %v1237, %v1499
        %v1602 = vadd.f32 %v1238, %v1502
        %v1603 = vadd.f32 %v1239, %v1507
        %v1604 = vadd.f32 %v1240, %v1510
        %v1605 = vadd.f32 %v1241, %v1515
        %v1606 = vadd.f32 %v1242, %v1518
        %v1607 = vadd.f32 %v1243, %v1523
        %v1608 = vadd.f32 %v1244, %v1526
        %v1609 = vadd.f32 %v1245, %v1531
        %v1610 = vadd.f32 %v1246, %v1534
        %v1611 = vadd.f32 %v1247, %v1539
        %v1612 = vadd.f32 %v1248, %v1542
        %v1613 = vadd.f32 %v1249, %v1547
        %v1614 = vadd.f32 %v1250, %v1550
        %v1615 = vadd.f32 %v1251, %v1555
        %v1616 = vadd.f32 %v1252, %v1558
        %v1617 = vadd.f32 %v1253, %v1563
        %v1618 = vadd.f32 %v1254, %v1566
        %v1619 = vadd.f32 %v1255, %v1571
        %v1620 = vadd.f32 %v1256, %v1574
        %v1621 = vadd.f32 %v1257, %v1579
        %v1622 = vadd.f32 %v1258, %v1582
        %v1623 = vadd.f32 %v1259, %v1587
        %v1624 = vadd.f32 %v1260, %v1590
        %s1625 = sadd.s32 %s232, 4
        %s1626 = smul.u32 %s1625, 16
        %s1627 = sshra.s32 %s1626, 3
        %s1628 = sand.u32 %s1626, 7
        %s1629 = smul.addr %s1627, 4
        %s1630 = scalar_lea.vmem %s199, %s1629 [#allocation2]
        %v1631 = vld [vmem:[%s1630] sm:$0xf]
        %v1632 = vld [vmem:[%s1630 + $0x4] sm:$0xf]
        %v1633 = vld [vmem:[%s1630 + $0x8] sm:$0xf]
        %v1634 = vld [vmem:[%s1630 + $0xc] sm:$0xf]
        %v1635 = vld [vmem:[%s1630 + $0x10] sm:$0xf]
        %v1636 = vld [vmem:[%s1630 + $0x14] sm:$0xf]
        %v1637 = vld [vmem:[%s1630 + $0x18] sm:$0xf]
        %v1638 = vld [vmem:[%s1630 + $0x1c] sm:$0xf]
        %v1639 = vld [vmem:[%s1630 + $0x20] sm:$0xf]
        %v1640 = vld [vmem:[%s1630 + $0x24] sm:$0xf]
        %v1641 = vld [vmem:[%s1630 + $0x28] sm:$0xf]
        %v1642 = vld [vmem:[%s1630 + $0x2c] sm:$0xf]
        %v1643 = vld [vmem:[%s1630 + $0x30] sm:$0xf]
        %v1644 = vld [vmem:[%s1630 + $0x34] sm:$0xf]
        %v1645 = vld [vmem:[%s1630 + $0x38] sm:$0xf]
        %v1646 = vld [vmem:[%s1630 + $0x3c] sm:$0xf]
        %v1647 = vld [vmem:[%s1630 + $0x40] sm:$0xf]
        %v1648 = vld [vmem:[%s1630 + $0x44] sm:$0xf]
        %v1649 = vld [vmem:[%s1630 + $0x48] sm:$0xf]
        %v1650 = vld [vmem:[%s1630 + $0x4c] sm:$0xf]
        %v1651 = vld [vmem:[%s1630 + $0x50] sm:$0xf]
        %v1652 = vld [vmem:[%s1630 + $0x54] sm:$0xf]
        %v1653 = vld [vmem:[%s1630 + $0x58] sm:$0xf]
        %v1654 = vld [vmem:[%s1630 + $0x5c] sm:$0xf]
        %v1655 = vld [vmem:[%s1630 + $0x60] sm:$0xf]
        %v1656 = vld [vmem:[%s1630 + $0x64] sm:$0xf]
        %v1657 = vld [vmem:[%s1630 + $0x68] sm:$0xf]
        %v1658 = vld [vmem:[%s1630 + $0x6c] sm:$0xf]
        %v1659 = vld [vmem:[%s1630 + $0x70] sm:$0xf]
        %v1660 = vld [vmem:[%s1630 + $0x74] sm:$0xf]
        %v1661 = vld [vmem:[%s1630 + $0x78] sm:$0xf]
        %v1662 = vld [vmem:[%s1630 + $0x7c] sm:$0xf]
        %s1663 = scalar_lea.vmem [#allocation5], 8
        %v1664 = vld [vmem:[%s1663] sm:$0x3]
        %v1697 = vunpack.c.l.b16 %v1631
        %v1698 = vunpack.c.l.b16 %v1632
        %v1699 = vunpack.c.l.b16 %v1633
        %v1700 = vunpack.c.l.b16 %v1634
        %v1701 = vunpack.c.l.b16 %v1635
        %v1702 = vunpack.c.l.b16 %v1636
        %v1703 = vunpack.c.l.b16 %v1637
        %v1704 = vunpack.c.l.b16 %v1638
        %v1705 = vunpack.c.l.b16 %v1639
        %v1706 = vunpack.c.l.b16 %v1640
        %v1707 = vunpack.c.l.b16 %v1641
        %v1708 = vunpack.c.l.b16 %v1642
        %v1709 = vunpack.c.l.b16 %v1643
        %v1710 = vunpack.c.l.b16 %v1644
        %v1711 = vunpack.c.l.b16 %v1645
        %v1712 = vunpack.c.l.b16 %v1646
        %v1713 = vunpack.c.l.b16 %v1647
        %v1714 = vunpack.c.l.b16 %v1648
        %v1715 = vunpack.c.l.b16 %v1649
        %v1716 = vunpack.c.l.b16 %v1650
        %v1717 = vunpack.c.l.b16 %v1651
        %v1718 = vunpack.c.l.b16 %v1652
        %v1719 = vunpack.c.l.b16 %v1653
        %v1720 = vunpack.c.l.b16 %v1654
        %v1721 = vunpack.c.l.b16 %v1655
        %v1722 = vunpack.c.l.b16 %v1656
        %v1723 = vunpack.c.l.b16 %v1657
        %v1724 = vunpack.c.l.b16 %v1658
        %v1725 = vunpack.c.l.b16 %v1659
        %v1726 = vunpack.c.l.b16 %v1660
        %v1727 = vunpack.c.l.b16 %v1661
        %v1728 = vunpack.c.l.b16 %v1662
        %v1729 = vpack.c.b16 %v1698, %v1697
        %v1730 = vpack.c.b16 %v1700, %v1699
        %v1731 = vpack.c.b16 %v1702, %v1701
        %v1732 = vpack.c.b16 %v1704, %v1703
        %v1733 = vpack.c.b16 %v1706, %v1705
        %v1734 = vpack.c.b16 %v1708, %v1707
        %v1735 = vpack.c.b16 %v1710, %v1709
        %v1736 = vpack.c.b16 %v1712, %v1711
        %v1737 = vpack.c.b16 %v1714, %v1713
        %v1738 = vpack.c.b16 %v1716, %v1715
        %v1739 = vpack.c.b16 %v1718, %v1717
        %v1740 = vpack.c.b16 %v1720, %v1719
        %v1741 = vpack.c.b16 %v1722, %v1721
        %v1742 = vpack.c.b16 %v1724, %v1723
        %v1743 = vpack.c.b16 %v1726, %v1725
        %v1744 = vpack.c.b16 %v1728, %v1727
        %v1746 = vsel %vm391, %v1729, 0
        %v1749 = vsel %vm391, %v1730, 0
        %v1752 = vsel %vm391, %v1731, 0
        %v1755 = vsel %vm391, %v1732, 0
        %v1758 = vsel %vm391, %v1733, 0
        %v1761 = vsel %vm391, %v1734, 0
        %v1764 = vsel %vm391, %v1735, 0
        %v1767 = vsel %vm391, %v1736, 0
        %v1770 = vsel %vm391, %v1737, 0
        %v1773 = vsel %vm391, %v1738, 0
        %v1776 = vsel %vm391, %v1739, 0
        %v1779 = vsel %vm391, %v1740, 0
        %v1782 = vsel %vm391, %v1741, 0
        %v1785 = vsel %vm391, %v1742, 0
        %v1788 = vsel %vm391, %v1743, 0
        %v1791 = vsel %vm391, %v1744, 0
        %v1794 = vsel %vm440, %v1664, 0
        %1796 = vmatprep.subr.bf16.mxu0 0
        %1797 = vmatpush1.bf16.msra.mxu0 %v1794
        %1798 = vmatprep.subr.bf16.mxu0 0
        %1799 = vmatpush1.bf16.msra.mxu0 0
        %1800 = vmatprep.subr.bf16.mxu0 0
        %1801 = vmatpush1.bf16.msra.mxu0 0
        %1802 = vmatprep.subr.bf16.mxu0 0
        %1803 = vmatpush1.bf16.msra.mxu0 0
        %1804 = vmatprep.subr.bf16.mxu0 0
        %1805 = vmatpush1.bf16.msra.mxu0 0
        %1806 = vmatprep.subr.bf16.mxu0 0
        %1807 = vmatpush1.bf16.msra.mxu0 0
        %1808 = vmatprep.subr.bf16.mxu0 0
        %1809 = vmatpush1.bf16.msra.mxu0 0
        %1810 = vmatprep.subr.bf16.mxu0 0
        %1811 = vmatpush1.bf16.msra.mxu0 0
        %1812 = vmatprep.subr.bf16.mxu0 0
        %1813 = vmatpush1.bf16.msra.mxu0 0
        %1814 = vmatprep.subr.bf16.mxu0 0
        %1815 = vmatpush1.bf16.msra.mxu0 0
        %1816 = vmatprep.subr.bf16.mxu0 0
        %1817 = vmatpush1.bf16.msra.mxu0 0
        %1818 = vmatprep.subr.bf16.mxu0 0
        %1819 = vmatpush1.bf16.msra.mxu0 0
        %1820 = vmatprep.subr.bf16.mxu0 0
        %1821 = vmatpush1.bf16.msra.mxu0 0
        %1822 = vmatprep.subr.bf16.mxu0 0
        %1823 = vmatpush1.bf16.msra.mxu0 0
        %1824 = vmatprep.subr.bf16.mxu0 0
        %1825 = vmatpush1.bf16.msra.mxu0 0
        %1826 = vmatprep.subr.bf16.mxu0 0
        %1827 = vmatpush1.bf16.msra.mxu0 0
        %1828 = vmatprep.mubr.bf16.mxu0 0
        %1829 = vmatmul.mubr.bf16.gmra.mrb[0].mxu0 %v1746
        %v1830 = vpop.f32.mrb[0].mxu0
        %v1831 = vadd.f32 0.0, %v1830
        %v1832 = vpop.f32.mrb[0].mxu0
        %v1833 = vpop.f32.mrb[0].mxu0
        %v1834 = vadd.f32 0.0, %v1833
        %v1835 = vpop.f32.mrb[0].mxu0
        %1836 = vmatprep.mubr.bf16.mxu0 0
        %1837 = vmatmul.mubr.bf16.gmra.mrb[0].mxu0 %v1749
        %v1838 = vpop.f32.mrb[0].mxu0
        %v1839 = vadd.f32 0.0, %v1838
        %v1840 = vpop.f32.mrb[0].mxu0
        %v1841 = vpop.f32.mrb[0].mxu0
        %v1842 = vadd.f32 0.0, %v1841
        %v1843 = vpop.f32.mrb[0].mxu0
        %1844 = vmatprep.mubr.bf16.mxu0 0
        %1845 = vmatmul.mubr.bf16.gmra.mrb[0].mxu0 %v1752
        %v1846 = vpop.f32.mrb[0].mxu0
        %v1847 = vadd.f32 0.0, %v1846
        %v1848 = vpop.f32.mrb[0].mxu0
        %v1849 = vpop.f32.mrb[0].mxu0
        %v1850 = vadd.f32 0.0, %v1849
        %v1851 = vpop.f32.mrb[0].mxu0
        %1852 = vmatprep.mubr.bf16.mxu0 0
        %1853 = vmatmul.mubr.bf16.gmra.mrb[0].mxu0 %v1755
        %v1854 = vpop.f32.mrb[0].mxu0
        %v1855 = vadd.f32 0.0, %v1854
        %v1856 = vpop.f32.mrb[0].mxu0
        %v1857 = vpop.f32.mrb[0].mxu0
        %v1858 = vadd.f32 0.0, %v1857
        %v1859 = vpop.f32.mrb[0].mxu0
        %1860 = vmatprep.mubr.bf16.mxu0 0
        %1861 = vmatmul.mubr.bf16.gmra.mrb[0].mxu0 %v1758
        %v1862 = vpop.f32.mrb[0].mxu0
        %v1863 = vadd.f32 0.0, %v1862
        %v1864 = vpop.f32.mrb[0].mxu0
        %v1865 = vpop.f32.mrb[0].mxu0
        %v1866 = vadd.f32 0.0, %v1865
        %v1867 = vpop.f32.mrb[0].mxu0
        %1868 = vmatprep.mubr.bf16.mxu0 0
        %1869 = vmatmul.mubr.bf16.gmra.mrb[0].mxu0 %v1761
        %v1870 = vpop.f32.mrb[0].mxu0
        %v1871 = vadd.f32 0.0, %v1870
        %v1872 = vpop.f32.mrb[0].mxu0
        %v1873 = vpop.f32.mrb[0].mxu0
        %v1874 = vadd.f32 0.0, %v1873
        %v1875 = vpop.f32.mrb[0].mxu0
        %1876 = vmatprep.mubr.bf16.mxu0 0
        %1877 = vmatmul.mubr.bf16.gmra.mrb[0].mxu0 %v1764
        %v1878 = vpop.f32.mrb[0].mxu0
        %v1879 = vadd.f32 0.0, %v1878
        %v1880 = vpop.f32.mrb[0].mxu0
        %v1881 = vpop.f32.mrb[0].mxu0
        %v1882 = vadd.f32 0.0, %v1881
        %v1883 = vpop.f32.mrb[0].mxu0
        %1884 = vmatprep.mubr.bf16.mxu0 0
        %1885 = vmatmul.mubr.bf16.gmra.mrb[0].mxu0 %v1767
        %v1886 = vpop.f32.mrb[0].mxu0
        %v1887 = vadd.f32 0.0, %v1886
        %v1888 = vpop.f32.mrb[0].mxu0
        %v1889 = vpop.f32.mrb[0].mxu0
        %v1890 = vadd.f32 0.0, %v1889
        %v1891 = vpop.f32.mrb[0].mxu0
        %1892 = vmatprep.mubr.bf16.mxu0 0
        %1893 = vmatmul.mubr.bf16.gmra.mrb[0].mxu0 %v1770
        %v1894 = vpop.f32.mrb[0].mxu0
        %v1895 = vadd.f32 0.0, %v1894
        %v1896 = vpop.f32.mrb[0].mxu0
        %v1897 = vpop.f32.mrb[0].mxu0
        %v1898 = vadd.f32 0.0, %v1897
        %v1899 = vpop.f32.mrb[0].mxu0
        %1900 = vmatprep.mubr.bf16.mxu0 0
        %1901 = vmatmul.mubr.bf16.gmra.mrb[0].mxu0 %v1773
        %v1902 = vpop.f32.mrb[0].mxu0
        %v1903 = vadd.f32 0.0, %v1902
        %v1904 = vpop.f32.mrb[0].mxu0
        %v1905 = vpop.f32.mrb[0].mxu0
        %v1906 = vadd.f32 0.0, %v1905
        %v1907 = vpop.f32.mrb[0].mxu0
        %1908 = vmatprep.mubr.bf16.mxu0 0
        %1909 = vmatmul.mubr.bf16.gmra.mrb[0].mxu0 %v1776
        %v1910 = vpop.f32.mrb[0].mxu0
        %v1911 = vadd.f32 0.0, %v1910
        %v1912 = vpop.f32.mrb[0].mxu0
        %v1913 = vpop.f32.mrb[0].mxu0
        %v1914 = vadd.f32 0.0, %v1913
        %v1915 = vpop.f32.mrb[0].mxu0
        %1916 = vmatprep.mubr.bf16.mxu0 0
        %1917 = vmatmul.mubr.bf16.gmra.mrb[0].mxu0 %v1779
        %v1918 = vpop.f32.mrb[0].mxu0
        %v1919 = vadd.f32 0.0, %v1918
        %v1920 = vpop.f32.mrb[0].mxu0
        %v1921 = vpop.f32.mrb[0].mxu0
        %v1922 = vadd.f32 0.0, %v1921
        %v1923 = vpop.f32.mrb[0].mxu0
        %1924 = vmatprep.mubr.bf16.mxu0 0
        %1925 = vmatmul.mubr.bf16.gmra.mrb[0].mxu0 %v1782
        %v1926 = vpop.f32.mrb[0].mxu0
        %v1927 = vadd.f32 0.0, %v1926
        %v1928 = vpop.f32.mrb[0].mxu0
        %v1929 = vpop.f32.mrb[0].mxu0
        %v1930 = vadd.f32 0.0, %v1929
        %v1931 = vpop.f32.mrb[0].mxu0
        %1932 = vmatprep.mubr.bf16.mxu0 0
        %1933 = vmatmul.mubr.bf16.gmra.mrb[0].mxu0 %v1785
        %v1934 = vpop.f32.mrb[0].mxu0
        %v1935 = vadd.f32 0.0, %v1934
        %v1936 = vpop.f32.mrb[0].mxu0
        %v1937 = vpop.f32.mrb[0].mxu0
        %v1938 = vadd.f32 0.0, %v1937
        %v1939 = vpop.f32.mrb[0].mxu0
        %1940 = vmatprep.mubr.bf16.mxu0 0
        %1941 = vmatmul.mubr.bf16.gmra.mrb[0].mxu0 %v1788
        %v1942 = vpop.f32.mrb[0].mxu0
        %v1943 = vadd.f32 0.0, %v1942
        %v1944 = vpop.f32.mrb[0].mxu0
        %v1945 = vpop.f32.mrb[0].mxu0
        %v1946 = vadd.f32 0.0, %v1945
        %v1947 = vpop.f32.mrb[0].mxu0
        %1948 = vmatprep.mubr.bf16.mxu0 0
        %1949 = vmatmul.mubr.bf16.gmra.mrb[0].mxu0 %v1791
        %v1950 = vpop.f32.mrb[0].mxu0
        %v1951 = vadd.f32 0.0, %v1950
        %v1952 = vpop.f32.mrb[0].mxu0
        %v1953 = vpop.f32.mrb[0].mxu0
        %v1954 = vadd.f32 0.0, %v1953
        %v1955 = vpop.f32.mrb[0].mxu0
        %1956 = vdwg.mxu0
        %v1957 = vadd.f32 %v1593, %v1831
        %v1958 = vadd.f32 %v1594, %v1834
        %v1959 = vadd.f32 %v1595, %v1839
        %v1960 = vadd.f32 %v1596, %v1842
        %v1961 = vadd.f32 %v1597, %v1847
        %v1962 = vadd.f32 %v1598, %v1850
        %v1963 = vadd.f32 %v1599, %v1855
        %v1964 = vadd.f32 %v1600, %v1858
        %v1965 = vadd.f32 %v1601, %v1863
        %v1966 = vadd.f32 %v1602, %v1866
        %v1967 = vadd.f32 %v1603, %v1871
        %v1968 = vadd.f32 %v1604, %v1874
        %v1969 = vadd.f32 %v1605, %v1879
        %v1970 = vadd.f32 %v1606, %v1882
        %v1971 = vadd.f32 %v1607, %v1887
        %v1972 = vadd.f32 %v1608, %v1890
        %v1973 = vadd.f32 %v1609, %v1895
        %v1974 = vadd.f32 %v1610, %v1898
        %v1975 = vadd.f32 %v1611, %v1903
        %v1976 = vadd.f32 %v1612, %v1906
        %v1977 = vadd.f32 %v1613, %v1911
        %v1978 = vadd.f32 %v1614, %v1914
        %v1979 = vadd.f32 %v1615, %v1919
        %v1980 = vadd.f32 %v1616, %v1922
        %v1981 = vadd.f32 %v1617, %v1927
        %v1982 = vadd.f32 %v1618, %v1930
        %v1983 = vadd.f32 %v1619, %v1935
        %v1984 = vadd.f32 %v1620, %v1938
        %v1985 = vadd.f32 %v1621, %v1943
        %v1986 = vadd.f32 %v1622, %v1946
        %v1987 = vadd.f32 %v1623, %v1951
        %v1988 = vadd.f32 %v1624, %v1954
        %v1989 = vld [vmem:[#allocation7] sm:$0x1]
        %v1991 = vlaneseq
        %v1992 = vshrl.u32 %v1991, 7
        %v1993 = vsub.s32 0, %v1992
        %v1994 = vrot.slane %v1989, %v1993
        %v1996 = vadd.f32 %v1957, %v1994
        %v1997 = vadd.f32 %v1958, %v1994
        %v1998 = vadd.f32 %v1959, %v1994
        %v1999 = vadd.f32 %v1960, %v1994
        %v2000 = vadd.f32 %v1961, %v1994
        %v2001 = vadd.f32 %v1962, %v1994
        %v2002 = vadd.f32 %v1963, %v1994
        %v2003 = vadd.f32 %v1964, %v1994
        %v2004 = vadd.f32 %v1965, %v1994
        %v2005 = vadd.f32 %v1966, %v1994
        %v2006 = vadd.f32 %v1967, %v1994
        %v2007 = vadd.f32 %v1968, %v1994
        %v2008 = vadd.f32 %v1969, %v1994
        %v2009 = vadd.f32 %v1970, %v1994
        %v2010 = vadd.f32 %v1971, %v1994
        %v2011 = vadd.f32 %v1972, %v1994
        %v2012 = vadd.f32 %v1973, %v1994
        %v2013 = vadd.f32 %v1974, %v1994
        %v2014 = vadd.f32 %v1975, %v1994
        %v2015 = vadd.f32 %v1976, %v1994
        %v2016 = vadd.f32 %v1977, %v1994
        %v2017 = vadd.f32 %v1978, %v1994
        %v2018 = vadd.f32 %v1979, %v1994
        %v2019 = vadd.f32 %v1980, %v1994
        %v2020 = vadd.f32 %v1981, %v1994
        %v2021 = vadd.f32 %v1982, %v1994
        %v2022 = vadd.f32 %v1983, %v1994
        %v2023 = vadd.f32 %v1984, %v1994
        %v2024 = vadd.f32 %v1985, %v1994
        %v2025 = vadd.f32 %v1986, %v1994
        %v2026 = vadd.f32 %v1987, %v1994
        %v2027 = vadd.f32 %v1988, %v1994
        %2028 = vst [vmem:[%s229] sm:$0xff] %v1996
        %2029 = vst [vmem:[%s229 + $0x8] sm:$0xff] %v1997
        %2030 = vst [vmem:[%s229 + $0x10] sm:$0xff] %v1998
        %2031 = vst [vmem:[%s229 + $0x18] sm:$0xff] %v1999
        %2032 = vst [vmem:[%s229 + $0x20] sm:$0xff] %v2000
        %2033 = vst [vmem:[%s229 + $0x28] sm:$0xff] %v2001
        %2034 = vst [vmem:[%s229 + $0x30] sm:$0xff] %v2002
        %2035 = vst [vmem:[%s229 + $0x38] sm:$0xff] %v2003
        %2036 = vst [vmem:[%s229 + $0x40] sm:$0xff] %v2004
        %2037 = vst [vmem:[%s229 + $0x48] sm:$0xff] %v2005
        %2038 = vst [vmem:[%s229 + $0x50] sm:$0xff] %v2006
        %2039 = vst [vmem:[%s229 + $0x58] sm:$0xff] %v2007
        %2040 = vst [vmem:[%s229 + $0x60] sm:$0xff] %v2008
        %2041 = vst [vmem:[%s229 + $0x68] sm:$0xff] %v2009
        %2042 = vst [vmem:[%s229 + $0x70] sm:$0xff] %v2010
        %2043 = vst [vmem:[%s229 + $0x78] sm:$0xff] %v2011
        %2044 = vst [vmem:[%s229 + $0x80] sm:$0xff] %v2012
        %2045 = vst [vmem:[%s229 + $0x88] sm:$0xff] %v2013
        %2046 = vst [vmem:[%s229 + $0x90] sm:$0xff] %v2014
        %2047 = vst [vmem:[%s229 + $0x98] sm:$0xff] %v2015
        %2048 = vst [vmem:[%s229 + $0xa0] sm:$0xff] %v2016
        %2049 = vst [vmem:[%s229 + $0xa8] sm:$0xff] %v2017
        %2050 = vst [vmem:[%s229 + $0xb0] sm:$0xff] %v2018
        %2051 = vst [vmem:[%s229 + $0xb8] sm:$0xff] %v2019
        %2052 = vst [vmem:[%s229 + $0xc0] sm:$0xff] %v2020
        %2053 = vst [vmem:[%s229 + $0xc8] sm:$0xff] %v2021
        %2054 = vst [vmem:[%s229 + $0xd0] sm:$0xff] %v2022
        %2055 = vst [vmem:[%s229 + $0xd8] sm:$0xff] %v2023
        %2056 = vst [vmem:[%s229 + $0xe0] sm:$0xff] %v2024
        %2057 = vst [vmem:[%s229 + $0xe8] sm:$0xff] %v2025
        %2058 = vst [vmem:[%s229 + $0xf0] sm:$0xff] %v2026
        %2059 = vst [vmem:[%s229 + $0xf8] sm:$0xff] %v2027
        %s2060 = sand.u32 %s111, 1
        %s2061 = scalar_lea.sflag [#allocation4], %s2060
        %s2062 = sand.u32 %s111, 1
        %s2063 = smul.addr %s2062, 256
        %s2064 = scalar_lea.vmem [#allocation8], %s2063
        // Predicated region
        $region45: #{unit_tcn_forward.1} parent=31 // pred_check
          %p2065 = pneg %p121
        $region46: #{unit_tcn_forward.1} parent=31 // pred_check_branch
          %2067 = sbr.rel (%p2065) target = $region48
        $region47: #{unit_tcn_forward.1} parent=31 // pred_region
          %s2068 = smul.u32 32, %s26
          %s2070 = ssub.s32 4096, 4096
          %2071 = vsyncadd %s2061, %s2070
          %s2072 = smul.addr %s25, 32
          %s2073 = sadd.s32 %s2068, %s2072
          %s2074 = smul.addr %s2073, 128
          %s2075 = scalar_lea.hbm %s3, %s2074
          %s2076 = sshll.u32 %s2064, 4
          %s2077 = int_to_ptr.vmem [resolvable:$true] %s2076
          %2082 = dma.vmem_to_hbm [thread:$0]  %s2077, 4096, %s2075, %s2061, 128, 128, 8
        $region48: #{unit_tcn_forward.1} parent=31 // pred_fallthru
          _
      $region32: #{unit_tcn_forward.1} parent=5 // pred_fallthru
        _
      %p2083 = scmp.le.s32.totalorder 2, %s16
      // Predicated region
      $region49: #{unit_tcn_forward.1} parent=5 // pred_check
        %p2084 = pneg %p2083
      $region50: #{unit_tcn_forward.1} parent=5 // pred_check_branch
        %2086 = sbr.rel (%p2084) target = $region52
      $region51: #{unit_tcn_forward.1} parent=5 // pred_region
        %s2087 = ssub.s32 %s16, 2
        // Predicated region
        $region53: #{unit_tcn_forward.1} parent=51 // pred_check
          %p2088 = pneg %p127
        $region54: #{unit_tcn_forward.1} parent=51 // pred_check_branch
          %2090 = sbr.rel (%p2088) target = $region56
        $region55: #{unit_tcn_forward.1} parent=51 // pred_region
          %s2091 = sand.u32 %s112, 1
          %s2092 = scalar_lea.sflag [#allocation4], %s2091
          %s2093 = sand.u32 %s112, 1
          %s2094 = smul.addr %s2093, 256
          %s2095 = scalar_lea.vmem [#allocation8], %s2094
          %2096 = dma.done %s2092, 4096
        $region56: #{unit_tcn_forward.1} parent=51 // pred_fallthru
          _
      $region52: #{unit_tcn_forward.1} parent=5 // pred_fallthru
        _
    $region6: #{unit_tcn_forward.1} parent=1 // loop_footer
      %s20 = sadd.s32 1, %s16
    $region7: #{unit_tcn_forward.1} parent=1 // loop_footer_branch
      %15 = sbr.rel target = $region3
    $region8: #{unit_tcn_forward.1} parent=1 // loop_exit
      _
    %2097 = vsyncpa [#allocation3], 1
    %s2098 = scalar_lea.sflag [#allocation3], 1
    %2099 = vsyncpa %s2098, 1
    %2100 = vsyncpa [#allocation6], 1
    %2101 = vsyncpa [#allocation4], 1
    %s2102 = scalar_lea.sflag [#allocation4], 1
    %2103 = vsyncpa %s2102, 1

</llo_original>
